<compile_context>
chip_gen: v6e
topology: v6e:2x2x1
jax: 0.10.0
libtpu: 0.0.40
codegen_flags: <defaults>
</compile_context>

<pallas_src>
import functools
import math

import jax
import jax.numpy as jnp
import numpy as np
from jax.experimental import pallas as pl
from jax.experimental.pallas import tpu as pltpu


def _round_up(x, m):
    return ((x + m - 1) // m) * m


def _pick_gene_chunk(g_pad):
    # largest lane-aligned chunk (<= 512) that divides the padded gene axis
    for c in (512, 384, 256, 128):
        if g_pad % c == 0:
            return c
    return g_pad


# ----------------------------- kernel 1: decoder ----------------------------- #

def _decoder_kernel(scales_ref, latent_ref, wh_ref, wbt_ref, log_bias_ref,
                    gene_mask_ref, md_ref, logbase_ref, kl_ref,
                    *, n_height, n_base):
    latent = latent_ref[...]                                   # (C, L)   bf16
    wh = wh_ref[...]                                           # (L, GK_pad) bf16
    wbt = wbt_ref[...]                                         # (L, G_pad)  bf16

    # mixture (height) delta on the MXU (bf16 x bf16 -> f32 accumulate)
    md_ref[...] = jnp.dot(latent, wh, preferred_element_type=jnp.float32)

    # baseline delta + log-softmax over all genes (pad lanes carry -1e30 bias)
    logits = log_bias_ref[...] + jnp.dot(latent, wbt,
                                         preferred_element_type=jnp.float32)
    m = jnp.max(logits, axis=-1, keepdims=True)
    lse = jnp.log(jnp.sum(jnp.exp(logits - m), axis=-1, keepdims=True)) + m
    logbase_ref[...] = logits - lse

    # Normal-prior KL sums: VPU/XLU filler while the MXU is busy above.
    whf = wh.astype(jnp.float32)
    wbtf = wbt.astype(jnp.float32)
    ssq_h = jnp.sum(whf * whf)                                 # pad cols are 0
    ssq_b = jnp.sum(gene_mask_ref[...] * (wbtf * wbtf))        # only genes_oi cols
    inv_var_h = jnp.full((1, 1), scales_ref[0], dtype=jnp.float32)
    inv_var_b = jnp.full((1, 1), scales_ref[1], dtype=jnp.float32)
    const_h = jnp.full((1, 1), scales_ref[2], dtype=jnp.float32)
    const_b = jnp.full((1, 1), scales_ref[3], dtype=jnp.float32)
    kl_ref[...] = (const_h * n_height - 0.5 * inv_var_h * ssq_h
                   + const_b * n_base - 0.5 * inv_var_b * ssq_b)


# ----------------------------- kernel 2: gather ------------------------------ #

def _gather_kernel(logbase_ref, gene_iota_ref, cell_ref, gene_ref, lr_ref,
                   *, n_genes, g_chunk, n_gchunks):
    # One lane-tile of cuts per grid step; fully parallel across steps.
    n_cells = logbase_ref.shape[0]
    tile_n = lr_ref.shape[1]
    gene = gene_ref[...]                                       # (1, Tn) int32

    # Gene pick via chunked one-hot matmul on the MXU:
    #   colvals[c, j] = logbase[c, gene[j]]
    colvals = jnp.zeros((n_cells, tile_n), jnp.float32)
    for c in range(n_gchunks):                                 # static unroll
        onehot_g = (gene_iota_ref[...] == (gene - c * g_chunk)
                    ).astype(jnp.float32)                      # (Gc, Tn)
        chunk = logbase_ref[:, c * g_chunk:(c + 1) * g_chunk]  # (C, Gc) static window
        colvals = colvals + jnp.dot(chunk, onehot_g,
                                    preferred_element_type=jnp.float32)

    # Cell pick: small C-row sublane reduction (O(C*Tn), once per tile).
    cell_iota = jax.lax.broadcasted_iota(jnp.int32, (n_cells, tile_n), 0)
    onehot_c = (cell_iota == cell_ref[...]).astype(jnp.float32)
    lr_ref[...] = (jnp.sum(onehot_c * colvals, axis=0, keepdims=True)
                   + math.log(n_genes))                        # lane-dense (1, Tn)


# ----------------------------- wrapper --------------------------------------- #

def model_forward(params, clustering_onehot, genes_oi, coordinates,
                  local_gene_ix, local_cellxgene_ix, localcellxgene_ix):
    W_height = params["delta_height_weight"]    # (G, L, K)
    W_base = params["delta_baseline_weight"]    # (G, L)
    baseline_bias = params["baseline_bias"]     # (G,)
    log_sigma_m = params["mixture_delta_p_scale"]
    log_sigma_b = params["baseline_delta_p_scale"]

    G, L, K = W_height.shape
    C = clustering_onehot.shape[0]
    Goi = int(genes_oi.shape[0])
    N = int(localcellxgene_ix.shape[0])

    TILE_N = 1024                                   # 512-2048; 1024 balances v5e/v6e vs v7x
    G_pad = _round_up(G, 128)
    GK = Goi * K
    GK_pad = _round_up(GK, 128)
    N_pad = _round_up(max(N, 1), TILE_N)
    num_tiles = N_pad // TILE_N
    g_chunk = _pick_gene_chunk(G_pad)
    n_gchunks = G_pad // g_chunk

    # --- decoder operands (bf16 for the MXU; softmax / select stay f32) ------
    latent = clustering_onehot.astype(jnp.bfloat16)
    wh_oi = W_height[genes_oi]                                     # (Goi, L, K)
    wh_mat = jnp.transpose(wh_oi, (1, 0, 2)).reshape(L, GK)        # (L, Goi*K)
    wh_mat = jnp.pad(wh_mat, ((0, 0), (0, GK_pad - GK))).astype(jnp.bfloat16)
    wbT = jnp.pad(W_base.T, ((0, 0), (0, G_pad - G))).astype(jnp.bfloat16)
    log_bias = jnp.pad(jnp.log(baseline_bias), (0, G_pad - G),
                       constant_values=-1e30).reshape(1, G_pad).astype(jnp.float32)
    gene_mask = (jnp.zeros((G_pad,), jnp.float32)
                 .at[genes_oi].set(1.0).reshape(1, G_pad))

    half_log2pi = 0.5 * math.log(2.0 * math.pi)
    scales = jnp.stack([
        jnp.exp(-2.0 * log_sigma_m),            # 1/sigma_m^2
        jnp.exp(-2.0 * log_sigma_b),            # 1/sigma_b^2
        -half_log2pi - log_sigma_m,             # per-element const (height)
        -half_log2pi - log_sigma_b,             # per-element const (baseline)
    ]).astype(jnp.float32)                      # (4,) -> SMEM

    dec_kernel = functools.partial(_decoder_kernel,
                                   n_height=Goi * L * K, n_base=Goi * L)
    md_pad, logbase, kl_out = pl.pallas_call(
        dec_kernel,
        out_shape=(
            jax.ShapeDtypeStruct((C, GK_pad), jnp.float32),
            jax.ShapeDtypeStruct((C, G_pad), jnp.float32),
            jax.ShapeDtypeStruct((1, 1), jnp.float32),
        ),
        grid_spec=pltpu.PrefetchScalarGridSpec(
            num_scalar_prefetch=0,
            grid=(1,),
            in_specs=[
                pl.BlockSpec(memory_space=pltpu.MemorySpace.SMEM),   # KL scales
                pl.BlockSpec((C, L), lambda i: (0, 0)),              # latent
                pl.BlockSpec((L, GK_pad), lambda i: (0, 0)),         # height weights
                pl.BlockSpec((L, G_pad), lambda i: (0, 0)),          # baseline weights^T
                pl.BlockSpec((1, G_pad), lambda i: (0, 0)),          # log baseline bias
                pl.BlockSpec((1, G_pad), lambda i: (0, 0)),          # genes_oi mask
            ],
            out_specs=(
                pl.BlockSpec((C, GK_pad), lambda i: (0, 0)),         # mixture delta
                pl.BlockSpec((C, G_pad), lambda i: (0, 0)),          # log baseline
                pl.BlockSpec((1, 1), lambda i: (0, 0)),              # KL sum
            ),
        ),
        compiler_params=pltpu.CompilerParams(
            dimension_semantics=("arbitrary",),
            vmem_limit_bytes=64 << 20),
    )(scales, latent, wh_mat, wbT, log_bias, gene_mask)

    # --- per-cut gather kernel: fully parallel over lane tiles of cuts -------
    # index decomposition done XLA-side: cell = idx // G, gene = idx % G
    idx = jnp.pad(localcellxgene_ix.astype(jnp.int32), (0, N_pad - N))
    cell_idx = (idx // G).reshape(1, N_pad)
    gene_idx = (idx % G).reshape(1, N_pad)
    # hoisted row-iota for the per-chunk gene one-hot (grid-invariant input)
    gene_iota = jax.lax.broadcasted_iota(jnp.int32, (g_chunk, TILE_N), 0)

    gather_kernel = functools.partial(_gather_kernel, n_genes=G,
                                      g_chunk=g_chunk, n_gchunks=n_gchunks)
    lr_pad = pl.pallas_call(
        gather_kernel,
        out_shape=jax.ShapeDtypeStruct((1, N_pad), jnp.float32),
        grid_spec=pltpu.PrefetchScalarGridSpec(
            num_scalar_prefetch=0,
            grid=(num_tiles,),
            in_specs=[
                pl.BlockSpec((C, G_pad), lambda i: (0, 0)),          # resident logbase
                pl.BlockSpec((g_chunk, TILE_N), lambda i: (0, 0)),   # hoisted gene iota
                pl.BlockSpec((1, TILE_N), lambda i: (0, i)),         # cell index tile
                pl.BlockSpec((1, TILE_N), lambda i: (0, i)),         # gene index tile
            ],
            out_specs=pl.BlockSpec((1, TILE_N), lambda i: (0, i)),   # lr (lane-dense)
        ),
        compiler_params=pltpu.CompilerParams(
            # no sequential carry -> safe to shard cut tiles across TensorCores
            dimension_semantics=("parallel",),
            vmem_limit_bytes=64 << 20),
    )(logbase, gene_iota, cell_idx, gene_idx)

    mixture_delta = md_pad[:, :GK].reshape(C, Goi, K)
    lr = lr_pad[0, :N]
    # padded cut lanes are simply sliced off; lr-sum + elbo assembly in XLA.
    elbo = -jnp.sum(lr) - kl_out[0, 0]

    # TODO(synk): DifferentialQuadraticSplineStack / TransformedDistribution.log_prob
    # (likelihood_position) is not defined in the provided source; its contribution
    # to the elbo is omitted. `coordinates`, `local_gene_ix`, `local_cellxgene_ix`
    # are the inputs it would consume.
    del coordinates, local_gene_ix, local_cellxgene_ix

    return elbo, lr, mixture_delta


# ----------------------------- reference (pure JAX) ------------------------- #

def reference_forward(params, clustering_onehot, genes_oi, localcellxgene_ix):
    W_height = params["delta_height_weight"]
    W_base = params["delta_baseline_weight"]
    baseline_bias = params["baseline_bias"]
    G, L, K = W_height.shape
    latent = clustering_onehot.astype(jnp.float32)
    wh_oi = W_height[genes_oi]
    mixture_delta = jnp.einsum("cl,glk->cgk", latent, wh_oi)
    baseline_delta = latent @ W_base.T
    log_baseline = jax.nn.log_softmax(
        jnp.log(baseline_bias)[None, :] + baseline_delta, axis=-1)
    lr = log_baseline.reshape(-1)[localcellxgene_ix] + math.log(G)
    sigma_m = jnp.exp(params["mixture_delta_p_scale"])
    sigma_b = jnp.exp(params["baseline_delta_p_scale"])

    def normal_logprob(x, sigma):
        return -jnp.log(sigma) - 0.5 * math.log(2.0 * math.pi) - 0.5 * (x / sigma) ** 2

    kl = (jnp.sum(normal_logprob(wh_oi, sigma_m))
          + jnp.sum(normal_logprob(W_base[genes_oi], sigma_b)))
    elbo = -jnp.sum(lr) - kl
    return elbo, lr, mixture_delta


# ----------------------------- main ----------------------------------------- #

if __name__ == "__main__":
    key = jax.random.PRNGKey(0)
    k1, k2, k3, k4, k5, k6 = jax.random.split(key, 6)

    # small synthetic problem sizes
    n_cells = 4          # C
    n_clusters = 8       # L (= n_latent of the decoder)
    n_genes = 16         # G (n_total_genes)
    n_components = 12    # K (n_delta_mixture_components)
    n_genes_oi = 8       # Goi
    n_cuts = 32          # N

    # deterministic parameter init (shapes from Model.__init__ / Decoder.__init__)
    stdv = 1.0 / math.sqrt(n_clusters)
    params = {
        # module zero-inits this; use small random values so the matmul is non-trivial
        "delta_height_weight": 0.1 * jax.random.normal(
            k1, (n_genes, n_clusters, n_components), dtype=jnp.float32),
        "delta_baseline_weight": jax.random.uniform(
            k2, (n_genes, n_clusters), minval=-stdv, maxval=stdv, dtype=jnp.float32),
        "baseline_bias": 1e-5 + (1 - 1e-5) * jax.random.uniform(
            k3, (n_genes,), dtype=jnp.float32),
        "mixture_delta_p_scale": jnp.float32(math.log(1.0)),
        "baseline_delta_p_scale": jnp.float32(math.log(1.0)),
    }

    # deterministic inputs (the contents of `data` in Model.forward)
    cluster_ids = jax.random.randint(k4, (n_cells,), 0, n_clusters)
    clustering_onehot = jax.nn.one_hot(cluster_ids, n_clusters, dtype=jnp.float32)
    genes_oi = jnp.array([0, 2, 3, 5, 7, 9, 12, 15], dtype=jnp.int32)
    coordinates = jax.random.uniform(k5, (n_cuts,), minval=-1.0, maxval=1.0)
    local_gene_ix = jax.random.randint(k6, (n_cuts,), 0, n_genes_oi)
    local_cellxgene_ix = jax.random.randint(
        jax.random.fold_in(key, 7), (n_cuts,), 0, n_cells * n_genes_oi)
    localcellxgene_ix = jax.random.randint(
        jax.random.fold_in(key, 8), (n_cuts,), 0, n_cells * n_genes)

    fwd = jax.jit(model_forward)
    elbo, lr, mixture_delta = fwd(
        params, clustering_onehot, genes_oi, coordinates,
        local_gene_ix, local_cellxgene_ix, localcellxgene_ix)
    jax.block_until_ready((elbo, lr, mixture_delta))

    elbo_ref, lr_ref, md_ref = reference_forward(
        params, clustering_onehot, genes_oi, localcellxgene_ix)
    # tolerances relaxed relative to the pure-f32 version: the decoder matmuls
    # (and the KL sum-of-squares) now consume bf16-rounded weights (<=0.4% rel).
    np.testing.assert_allclose(np.asarray(mixture_delta), np.asarray(md_ref),
                               rtol=1e-2, atol=1e-2)
    np.testing.assert_allclose(np.asarray(lr), np.asarray(lr_ref),
                               rtol=1e-2, atol=1e-2)
    np.testing.assert_allclose(float(elbo), float(elbo_ref), rtol=1e-3, atol=0.5)

    print("KERNEL_OK")
</pallas_src>

<mosaic_0001>
module attributes {stable_mosaic.version = 11 : i64} {
  func.func @_decoder_kernel(%arg0: i32, %arg1: memref<4xf32, #tpu.memory_space<smem>>, %arg2: memref<4x8xbf16, #tpu.memory_space<vmem>>, %arg3: memref<8x128xbf16, #tpu.memory_space<vmem>>, %arg4: memref<8x128xbf16, #tpu.memory_space<vmem>>, %arg5: memref<1x128xf32, #tpu.memory_space<vmem>>, %arg6: memref<1x128xf32, #tpu.memory_space<vmem>>, %arg7: memref<4x128xf32, #tpu.memory_space<vmem>>, %arg8: memref<4x128xf32, #tpu.memory_space<vmem>>, %arg9: memref<1x1xf32, #tpu.memory_space<vmem>>) attributes {dimension_semantics = [#tpu.dimension_semantics<arbitrary>], iteration_bounds = array<i64: 1>, scalar_prefetch = 0 : i64, scratch_operands = 0 : i64, tpu.core_type = #tpu.core_type<tc>, window_params = [{transform_indices = @transform_0, window_bounds = array<i64: 4>}, {pipeline_mode = #tpu.pipeline_mode<synchronous>, transform_indices = @transform_1, window_bounds = array<i64: 4, 8>}, {pipeline_mode = #tpu.pipeline_mode<synchronous>, transform_indices = @transform_2, window_bounds = array<i64: 8, 128>}, {pipeline_mode = #tpu.pipeline_mode<synchronous>, transform_indices = @transform_3, window_bounds = array<i64: 8, 128>}, {pipeline_mode = #tpu.pipeline_mode<synchronous>, transform_indices = @transform_4, window_bounds = array<i64: 1, 128>}, {pipeline_mode = #tpu.pipeline_mode<synchronous>, transform_indices = @transform_5, window_bounds = array<i64: 1, 128>}, {pipeline_mode = #tpu.pipeline_mode<synchronous>, transform_indices = @transform_6, window_bounds = array<i64: 4, 128>}, {pipeline_mode = #tpu.pipeline_mode<synchronous>, transform_indices = @transform_7, window_bounds = array<i64: 4, 128>}, {pipeline_mode = #tpu.pipeline_mode<synchronous>, transform_indices = @transform_8, window_bounds = array<i64: 1, 1>}]} {
    %c0 = arith.constant 0 : index
    %c0_0 = arith.constant 0 : index
    %0 = vector.load %arg2[%c0, %c0_0] : memref<4x8xbf16, #tpu.memory_space<vmem>>, vector<4x8xbf16>
    %c0_1 = arith.constant 0 : index
    %c0_2 = arith.constant 0 : index
    %1 = vector.load %arg3[%c0_1, %c0_2] : memref<8x128xbf16, #tpu.memory_space<vmem>>, vector<8x128xbf16>
    %c0_3 = arith.constant 0 : index
    %c0_4 = arith.constant 0 : index
    %2 = vector.load %arg4[%c0_3, %c0_4] : memref<8x128xbf16, #tpu.memory_space<vmem>>, vector<8x128xbf16>
    %cst = arith.constant dense<0.000000e+00> : vector<4x128xf32>
    %3 = tpu.matmul %0, %1, %cst {dimension_numbers = #tpu.dot_dimension_numbers<[1], [0], [0], [1], [0, 0, 1, 1], [], []>} : vector<4x8xbf16>, vector<8x128xbf16>, vector<4x128xf32> -> vector<4x128xf32>
    %c0_5 = arith.constant 0 : index
    %c0_6 = arith.constant 0 : index
    %4 = vector.load %arg7[%c0_5, %c0_6] : memref<4x128xf32, #tpu.memory_space<vmem>>, vector<4x128xf32>
    tpu.vector_store %arg7[%c0_5, %c0_6], %3 {strides = array<i32>} : memref<4x128xf32, #tpu.memory_space<vmem>>, vector<4x128xf32>,
    %c0_7 = arith.constant 0 : index
    %c0_8 = arith.constant 0 : index
    %5 = vector.load %arg5[%c0_7, %c0_8] : memref<1x128xf32, #tpu.memory_space<vmem>>, vector<1x128xf32>
    %cst_9 = arith.constant dense<0.000000e+00> : vector<4x128xf32>
    %6 = tpu.matmul %0, %2, %cst_9 {dimension_numbers = #tpu.dot_dimension_numbers<[1], [0], [0], [1], [0, 0, 1, 1], [], []>} : vector<4x8xbf16>, vector<8x128xbf16>, vector<4x128xf32> -> vector<4x128xf32>
    %7 = vector.broadcast %5 : vector<1x128xf32> to vector<4x128xf32>
    %8 = arith.addf %7, %6 : vector<4x128xf32>
    %cst_10 = arith.constant dense<0xFF800000> : vector<4xf32>
    %9 = vector.multi_reduction <maximumf>, %8, %cst_10 [1] : vector<4x128xf32> to vector<4xf32>
    %10 = vector.shape_cast %9 : vector<4xf32> to vector<4x1xf32>
    %11 = vector.broadcast %10 : vector<4x1xf32> to vector<4x128xf32>
    %12 = arith.subf %8, %11 : vector<4x128xf32>
    %13 = math.exp %12 : vector<4x128xf32>
    %cst_11 = arith.constant dense<0.000000e+00> : vector<4xf32>
    %14 = vector.multi_reduction <add>, %13, %cst_11 [1] : vector<4x128xf32> to vector<4xf32>
    %15 = vector.shape_cast %14 : vector<4xf32> to vector<4x1xf32>
    %16 = math.log %15 : vector<4x1xf32>
    %17 = arith.addf %16, %10 : vector<4x1xf32>
    %18 = vector.broadcast %17 : vector<4x1xf32> to vector<4x128xf32>
    %19 = arith.subf %8, %18 : vector<4x128xf32>
    %c0_12 = arith.constant 0 : index
    %c0_13 = arith.constant 0 : index
    %20 = vector.load %arg8[%c0_12, %c0_13] : memref<4x128xf32, #tpu.memory_space<vmem>>, vector<4x128xf32>
    tpu.vector_store %arg8[%c0_12, %c0_13], %19 {strides = array<i32>} : memref<4x128xf32, #tpu.memory_space<vmem>>, vector<4x128xf32>,
    %21 = arith.extf %1 : vector<8x128xbf16> to vector<8x128xf32>
    %22 = arith.extf %2 : vector<8x128xbf16> to vector<8x128xf32>
    %23 = arith.mulf %21, %21 : vector<8x128xf32>
    %24 = vector.shape_cast %23 : vector<8x128xf32> to vector<1x8x128xf32>
    %cst_14 = arith.constant dense<0.000000e+00> : vector<1xf32>
    %25 = vector.multi_reduction <add>, %24, %cst_14 [1, 2] : vector<1x8x128xf32> to vector<1xf32>
    %26 = vector.shape_cast %25 : vector<1xf32> to vector<1x1x1xf32>
    %27 = vector.extract %26[0, 0, 0] : f32 from vector<1x1x1xf32>
    %c0_15 = arith.constant 0 : index
    %c0_16 = arith.constant 0 : index
    %28 = vector.load %arg6[%c0_15, %c0_16] : memref<1x128xf32, #tpu.memory_space<vmem>>, vector<1x128xf32>
    %29 = arith.mulf %22, %22 : vector<8x128xf32>
    %30 = vector.broadcast %28 : vector<1x128xf32> to vector<8x128xf32>
    %31 = arith.mulf %30, %29 : vector<8x128xf32>
    %32 = vector.shape_cast %31 : vector<8x128xf32> to vector<1x8x128xf32>
    %cst_17 = arith.constant dense<0.000000e+00> : vector<1xf32>
    %33 = vector.multi_reduction <add>, %32, %cst_17 [1, 2] : vector<1x8x128xf32> to vector<1xf32>
    %34 = vector.shape_cast %33 : vector<1xf32> to vector<1x1x1xf32>
    %35 = vector.extract %34[0, 0, 0] : f32 from vector<1x1x1xf32>
    %c0_18 = arith.constant 0 : index
    %36 = memref.load %arg1[%c0_18] : memref<4xf32, #tpu.memory_space<smem>>
    %37 = vector.broadcast %36 : f32 to vector<1x1xf32>
    %c1 = arith.constant 1 : index
    %38 = memref.load %arg1[%c1] : memref<4xf32, #tpu.memory_space<smem>>
    %39 = vector.broadcast %38 : f32 to vector<1x1xf32>
    %c2 = arith.constant 2 : index
    %40 = memref.load %arg1[%c2] : memref<4xf32, #tpu.memory_space<smem>>
    %41 = vector.broadcast %40 : f32 to vector<1x1xf32>
    %c3 = arith.constant 3 : index
    %42 = memref.load %arg1[%c3] : memref<4xf32, #tpu.memory_space<smem>>
    %43 = vector.broadcast %42 : f32 to vector<1x1xf32>
    %cst_19 = arith.constant 7.680000e+02 : f32
    %44 = vector.broadcast %cst_19 : f32 to vector<1x1xf32>
    %45 = arith.mulf %41, %44 : vector<1x1xf32>
    %cst_20 = arith.constant 5.000000e-01 : f32
    %46 = vector.broadcast %cst_20 : f32 to vector<1x1xf32>
    %47 = arith.mulf %46, %37 : vector<1x1xf32>
    %48 = vector.broadcast %27 : f32 to vector<1x1xf32>
    %49 = arith.mulf %47, %48 : vector<1x1xf32>
    %50 = arith.subf %45, %49 : vector<1x1xf32>
    %cst_21 = arith.constant 6.400000e+01 : f32
    %51 = vector.broadcast %cst_21 : f32 to vector<1x1xf32>
    %52 = arith.mulf %43, %51 : vector<1x1xf32>
    %53 = arith.addf %50, %52 : vector<1x1xf32>
    %cst_22 = arith.constant 5.000000e-01 : f32
    %54 = vector.broadcast %cst_22 : f32 to vector<1x1xf32>
    %55 = arith.mulf %54, %39 : vector<1x1xf32>
    %56 = vector.broadcast %35 : f32 to vector<1x1xf32>
    %57 = arith.mulf %55, %56 : vector<1x1xf32>
    %58 = arith.subf %53, %57 : vector<1x1xf32>
    %c0_23 = arith.constant 0 : index
    %c0_24 = arith.constant 0 : index
    %59 = vector.load %arg9[%c0_23, %c0_24] : memref<1x1xf32, #tpu.memory_space<vmem>>, vector<1x1xf32>
    tpu.vector_store %arg9[%c0_23, %c0_24], %58 {strides = array<i32>} : memref<1x1xf32, #tpu.memory_space<vmem>>, vector<1x1xf32>,
    return
  }
  func.func @transform_0(%arg0: i32) -> i32 {
    %c0_i32 = arith.constant 0 : i32
    %c0_i32_0 = arith.constant 0 : i32
    return %c0_i32 : i32
  }
  func.func @transform_1(%arg0: i32) -> (i32, i32) {
    %c0_i32 = arith.constant 0 : i32
    %c0_i32_0 = arith.constant 0 : i32
    %c0_i32_1 = arith.constant 0 : i32
    return %c0_i32, %c0_i32_0 : i32, i32
  }
  func.func @transform_2(%arg0: i32) -> (i32, i32) {
    %c0_i32 = arith.constant 0 : i32
    %c0_i32_0 = arith.constant 0 : i32
    %c0_i32_1 = arith.constant 0 : i32
    return %c0_i32, %c0_i32_0 : i32, i32
  }
  func.func @transform_3(%arg0: i32) -> (i32, i32) {
    %c0_i32 = arith.constant 0 : i32
    %c0_i32_0 = arith.constant 0 : i32
    %c0_i32_1 = arith.constant 0 : i32
    return %c0_i32, %c0_i32_0 : i32, i32
  }
  func.func @transform_4(%arg0: i32) -> (i32, i32) {
    %c0_i32 = arith.constant 0 : i32
    %c0_i32_0 = arith.constant 0 : i32
    %c0_i32_1 = arith.constant 0 : i32
    return %c0_i32, %c0_i32_0 : i32, i32
  }
  func.func @transform_5(%arg0: i32) -> (i32, i32) {
    %c0_i32 = arith.constant 0 : i32
    %c0_i32_0 = arith.constant 0 : i32
    %c0_i32_1 = arith.constant 0 : i32
    return %c0_i32, %c0_i32_0 : i32, i32
  }
  func.func @transform_6(%arg0: i32) -> (i32, i32) {
    %c0_i32 = arith.constant 0 : i32
    %c0_i32_0 = arith.constant 0 : i32
    %c0_i32_1 = arith.constant 0 : i32
    return %c0_i32, %c0_i32_0 : i32, i32
  }
  func.func @transform_7(%arg0: i32) -> (i32, i32) {
    %c0_i32 = arith.constant 0 : i32
    %c0_i32_0 = arith.constant 0 : i32
    %c0_i32_1 = arith.constant 0 : i32
    return %c0_i32, %c0_i32_0 : i32, i32
  }
  func.func @transform_8(%arg0: i32) -> (i32, i32) {
    %c0_i32 = arith.constant 0 : i32
    %c0_i32_0 = arith.constant 0 : i32
    %c0_i32_1 = arith.constant 0 : i32
    return %c0_i32, %c0_i32_0 : i32, i32
  }
}

module attributes {stable_mosaic.version = 11 : i64} {
  func.func @_gather_kernel(%arg0: i32, %arg1: memref<4x128xf32, #tpu.memory_space<vmem>>, %arg2: memref<128x1024xi32, #tpu.memory_space<vmem>>, %arg3: memref<1x1024xi32, #tpu.memory_space<vmem>>, %arg4: memref<1x1024xi32, #tpu.memory_space<vmem>>, %arg5: memref<1x1024xf32, #tpu.memory_space<vmem>>) attributes {dimension_semantics = [#tpu.dimension_semantics<parallel>], iteration_bounds = array<i64: 1>, scalar_prefetch = 0 : i64, scratch_operands = 0 : i64, tpu.core_type = #tpu.core_type<tc>, window_params = [{pipeline_mode = #tpu.pipeline_mode<synchronous>, transform_indices = @transform_0, window_bounds = array<i64: 4, 128>}, {pipeline_mode = #tpu.pipeline_mode<synchronous>, transform_indices = @transform_1, window_bounds = array<i64: 128, 1024>}, {transform_indices = @transform_2, window_bounds = array<i64: 1, 1024>}, {transform_indices = @transform_3, window_bounds = array<i64: 1, 1024>}, {transform_indices = @transform_4, window_bounds = array<i64: 1, 1024>}]} {
    %c0 = arith.constant 0 : index
    %c0_0 = arith.constant 0 : index
    %0 = vector.load %arg4[%c0, %c0_0] : memref<1x1024xi32, #tpu.memory_space<vmem>>, vector<1x1024xi32>
    %cst = arith.constant 0.000000e+00 : f32
    %1 = vector.broadcast %cst : f32 to vector<4x1024xf32>
    %c0_1 = arith.constant 0 : index
    %c0_2 = arith.constant 0 : index
    %2 = vector.load %arg2[%c0_1, %c0_2] : memref<128x1024xi32, #tpu.memory_space<vmem>>, vector<128x1024xi32>
    %c0_i32 = arith.constant 0 : i32
    %3 = vector.broadcast %c0_i32 : i32 to vector<1x1024xi32>
    %4 = arith.subi %0, %3 : vector<1x1024xi32>
    %5 = vector.broadcast %4 : vector<1x1024xi32> to vector<128x1024xi32>
    %6 = arith.cmpi eq, %2, %5 : vector<128x1024xi32>
    %7 = arith.extui %6 : vector<128x1024xi1> to vector<128x1024xi32>
    %8 = arith.sitofp %7 : vector<128x1024xi32> to vector<128x1024xf32>
    %c0_3 = arith.constant 0 : index
    %c0_4 = arith.constant 0 : index
    %9 = vector.load %arg1[%c0_3, %c0_4] : memref<4x128xf32, #tpu.memory_space<vmem>>, vector<4x128xf32>
    %cst_5 = arith.constant dense<0.000000e+00> : vector<4x1024xf32>
    %10 = tpu.matmul %9, %8, %cst_5 {dimension_numbers = #tpu.dot_dimension_numbers<[1], [0], [0], [1], [0, 0, 1, 1], [], []>} : vector<4x128xf32>, vector<128x1024xf32>, vector<4x1024xf32> -> vector<4x1024xf32>
    %11 = arith.addf %1, %10 : vector<4x1024xf32>
    %12 = tpu.iota {dimensions = array<i32: 0>} : vector<4x1024xi32>
    %c0_6 = arith.constant 0 : index
    %c0_7 = arith.constant 0 : index
    %13 = vector.load %arg3[%c0_6, %c0_7] : memref<1x1024xi32, #tpu.memory_space<vmem>>, vector<1x1024xi32>
    %14 = vector.broadcast %13 : vector<1x1024xi32> to vector<4x1024xi32>
    %15 = arith.cmpi eq, %12, %14 : vector<4x1024xi32>
    %16 = arith.extui %15 : vector<4x1024xi1> to vector<4x1024xi32>
    %17 = arith.sitofp %16 : vector<4x1024xi32> to vector<4x1024xf32>
    %18 = arith.mulf %17, %11 : vector<4x1024xf32>
    %cst_8 = arith.constant dense<0.000000e+00> : vector<1024xf32>
    %19 = vector.multi_reduction <add>, %18, %cst_8 [0] : vector<4x1024xf32> to vector<1024xf32>
    %20 = vector.shape_cast %19 : vector<1024xf32> to vector<1x1024xf32>
    %cst_9 = arith.constant 2.77258873 : f32
    %21 = vector.broadcast %cst_9 : f32 to vector<1x1024xf32>
    %22 = arith.addf %20, %21 : vector<1x1024xf32>
    %c0_10 = arith.constant 0 : index
    %c0_11 = arith.constant 0 : index
    %23 = vector.load %arg5[%c0_10, %c0_11] : memref<1x1024xf32, #tpu.memory_space<vmem>>, vector<1x1024xf32>
    tpu.vector_store %arg5[%c0_10, %c0_11], %22 {strides = array<i32>} : memref<1x1024xf32, #tpu.memory_space<vmem>>, vector<1x1024xf32>,
    return
  }
  func.func @transform_0(%arg0: i32) -> (i32, i32) {
    %c0_i32 = arith.constant 0 : i32
    %c0_i32_0 = arith.constant 0 : i32
    %c0_i32_1 = arith.constant 0 : i32
    return %c0_i32, %c0_i32_0 : i32, i32
  }
  func.func @transform_1(%arg0: i32) -> (i32, i32) {
    %c0_i32 = arith.constant 0 : i32
    %c0_i32_0 = arith.constant 0 : i32
    %c0_i32_1 = arith.constant 0 : i32
    return %c0_i32, %c0_i32_0 : i32, i32
  }
  func.func @transform_2(%arg0: i32) -> (i32, i32) {
    %c0_i32 = arith.constant 0 : i32
    %c0_i32_0 = arith.constant 0 : i32
    return %c0_i32, %arg0 : i32, i32
  }
  func.func @transform_3(%arg0: i32) -> (i32, i32) {
    %c0_i32 = arith.constant 0 : i32
    %c0_i32_0 = arith.constant 0 : i32
    return %c0_i32, %arg0 : i32, i32
  }
  func.func @transform_4(%arg0: i32) -> (i32, i32) {
    %c0_i32 = arith.constant 0 : i32
    %c0_i32_0 = arith.constant 0 : i32
    return %c0_i32, %arg0 : i32, i32
  }
}

</mosaic_0001>

<llo_original>
// kernel: model_forward.2
$region0: #{model_forward.2}
  #allocation0 [shape = 'u32[]', space=smem, size = 0x4, offset = 0x4, fixed_abs, tag = 'smem constant byte address 0x4 - core index']
  #allocation1 [shape = 'u32[144,128]{1,0:T(1,128)}', space=vmem, size = 0x12000, scoped, tag = 'internal scratch']
  %s0 = inlined_call_operand.vmem [shape: f32[4], index: 0, kind: input, shape index: {}]
  %s1 = inlined_call_operand.vmem [shape: bf16[4,8], index: 1, kind: input, shape index: {}]
  %s2 = inlined_call_operand.vmem [shape: bf16[8,128], index: 2, kind: input, shape index: {}]
  %s3 = inlined_call_operand.vmem [shape: bf16[8,128], index: 3, kind: input, shape index: {}]
  %s4 = inlined_call_operand.vmem [shape: f32[1,128], index: 4, kind: input, shape index: {}]
  %s5 = inlined_call_operand.vmem [shape: f32[1,128], index: 5, kind: input, shape index: {}]
  %s6 = inlined_call_operand.vmem [shape: f32[4,128], index: 6, kind: output, shape index: {0}]
  %s7 = inlined_call_operand.vmem [shape: f32[4,128], index: 7, kind: output, shape index: {1}]
  %s8 = inlined_call_operand.hbm [shape: f32[1,1], index: 8, kind: output, shape index: {2}]
  %9 = xla_tuple %s6, %s7, %s8
  %s10 = sld [smem:[#allocation0]]
  $region54: #{model_forward.2} parent=0
    _
  %s12 = ssub.s32 1, %s10
  %s13 = scalar_select 0, %s12, %s10
  $region1: #{model_forward.2} parent=0
    #allocation2 [shape = 'u8[512]{0}', space=smem, size = 0x200, scoped, tag = 'input window, operand 0, single buffered']
    #allocation3 [shape = 's32[1]{0}', space=sflag, size = 0x4, scoped, tag = 'scoped memory for model_forward.2']
    #allocation4 [shape = 's32[1]{0}', space=sflag, size = 0x4, scoped, tag = 'scoped memory for model_forward.2']
    #allocation5 [shape = 'u8[512]{0}', space=vmem, size = 0x400, scoped, tag = 'output window, operand 2, single buffered']
    %14 = vsyncpa [#allocation4], 0
    %15 = vsyncpa [#allocation3], 0
    // Predicated region
    $region2: #{model_forward.2} parent=1 // pred_check
      _
    $region3: #{model_forward.2} parent=1 // pred_check_branch
      %17 = sbr.rel (0) target = $region5
    $region4: #{model_forward.2} parent=1 // pred_region
      %s19 = ssub.s32 16, 16
      %20 = vsyncadd [#allocation4], %s19
      %s22 = sshll.u32 %s0, 4
      %s23 = int_to_ptr.vmem [resolvable:$true] %s22
      %25 = dma.vmem_to_smem %s23, 16, [#allocation2], [#allocation4]
    $region5: #{model_forward.2} parent=1 // pred_fallthru
      _
    // Predicated region
    $region6: #{model_forward.2} parent=1 // pred_check
      _
    $region7: #{model_forward.2} parent=1 // pred_check_branch
      %27 = sbr.rel (0) target = $region9
    $region8: #{model_forward.2} parent=1 // pred_region
      _
    $region9: #{model_forward.2} parent=1 // pred_fallthru
      _
    // Predicated region
    $region10: #{model_forward.2} parent=1 // pred_check
      _
    $region11: #{model_forward.2} parent=1 // pred_check_branch
      %29 = sbr.rel (0) target = $region13
    $region12: #{model_forward.2} parent=1 // pred_region
      _
    $region13: #{model_forward.2} parent=1 // pred_fallthru
      _
    // Predicated region
    $region14: #{model_forward.2} parent=1 // pred_check
      _
    $region15: #{model_forward.2} parent=1 // pred_check_branch
      %31 = sbr.rel (0) target = $region17
    $region16: #{model_forward.2} parent=1 // pred_region
      _
    $region17: #{model_forward.2} parent=1 // pred_fallthru
      _
    // Predicated region
    $region18: #{model_forward.2} parent=1 // pred_check
      _
    $region19: #{model_forward.2} parent=1 // pred_check_branch
      %33 = sbr.rel (0) target = $region21
    $region20: #{model_forward.2} parent=1 // pred_region
      _
    $region21: #{model_forward.2} parent=1 // pred_fallthru
      _
    // Predicated region
    $region22: #{model_forward.2} parent=1 // pred_check
      _
    $region23: #{model_forward.2} parent=1 // pred_check_branch
      %35 = sbr.rel (0) target = $region25
    $region24: #{model_forward.2} parent=1 // pred_region
      _
    $region25: #{model_forward.2} parent=1 // pred_fallthru
      _
    // Predicated region
    $region26: #{model_forward.2} parent=1 // pred_check
      _
    $region27: #{model_forward.2} parent=1 // pred_check_branch
      %37 = sbr.rel (0) target = $region29
    $region28: #{model_forward.2} parent=1 // pred_region
      %38 = dma.done [#allocation4], 16
    $region29: #{model_forward.2} parent=1 // pred_fallthru
      _
    %39 = sfence
    %v41 = vld [vmem:[%s1] sm:$0x3]
    %v42 = vld [vmem:[%s2] sm:$0xf]
    %v43 = vld [vmem:[%s3] sm:$0xf]
    %vm44 = vcmask 64512
    %v46 = vsel %vm44, %v41, 0
    %vm48 = vcmask 1043456
    %v50 = vsel %vm48, %v42, 0
    %52 = vmatprep.subr.bf16.mxu0 0
    %53 = vmatpush1.bf16.msra.mxu0 0
    %54 = vmatprep.subr.bf16.mxu0 0
    %55 = vmatpush1.bf16.msra.mxu0 0
    %56 = vmatprep.subr.bf16.mxu0 0
    %57 = vmatpush1.bf16.msra.mxu0 0
    %58 = vmatprep.subr.bf16.mxu0 0
    %59 = vmatpush1.bf16.msra.mxu0 0
    %60 = vmatprep.subr.bf16.mxu0 0
    %61 = vmatpush1.bf16.msra.mxu0 0
    %62 = vmatprep.subr.bf16.mxu0 0
    %63 = vmatpush1.bf16.msra.mxu0 0
    %64 = vmatprep.subr.bf16.mxu0 0
    %65 = vmatpush1.bf16.msra.mxu0 0
    %66 = vmatprep.subr.bf16.mxu0 0
    %67 = vmatpush1.bf16.msra.mxu0 %v50
    %68 = vmatprep.subr.bf16.mxu0 0
    %69 = vmatpush2.bf16.msra.mxu0 0
    %70 = vmatprep.subr.bf16.mxu0 0
    %71 = vmatpush2.bf16.msra.mxu0 0
    %72 = vmatprep.subr.bf16.mxu0 0
    %73 = vmatpush2.bf16.msra.mxu0 0
    %74 = vmatprep.subr.bf16.mxu0 0
    %75 = vmatpush2.bf16.msra.mxu0 0
    %76 = vmatprep.subr.bf16.mxu0 0
    %77 = vmatpush2.bf16.msra.mxu0 0
    %78 = vmatprep.subr.bf16.mxu0 0
    %79 = vmatpush2.bf16.msra.mxu0 0
    %80 = vmatprep.subr.bf16.mxu0 0
    %81 = vmatpush2.bf16.msra.mxu0 0
    %82 = vmatprep.subr.bf16.mxu0 0
    %83 = vmatpush2.bf16.msra.mxu0 0
    %84 = vmatprep.mubr.bf16.mxu0 0
    %85 = vmatmul.mubr.bf16.gmra.mxu0 %v46
    %v86 = vpop.f32.mrf.mxu0
    %v87 = vadd.f32 0.0, %v86
    %v88 = vpop.f32.mrf.mxu0
    %v89 = vpop.f32.mrf.mxu0
    %v90 = vpop.f32.mrf.mxu0
    %91 = vdwg.mxu0
    %92 = vst [vmem:[%s6] sm:$0xf] %v87
    %v93 = vld [vmem:[%s4] sm:$0x1]
    %v95 = vsel %vm48, %v43, 0
    %97 = vmatprep.subr.bf16.mxu0 0
    %98 = vmatpush1.bf16.msra.mxu0 0
    %99 = vmatprep.subr.bf16.mxu0 0
    %100 = vmatpush1.bf16.msra.mxu0 0
    %101 = vmatprep.subr.bf16.mxu0 0
    %102 = vmatpush1.bf16.msra.mxu0 0
    %103 = vmatprep.subr.bf16.mxu0 0
    %104 = vmatpush1.bf16.msra.mxu0 0
    %105 = vmatprep.subr.bf16.mxu0 0
    %106 = vmatpush1.bf16.msra.mxu0 0
    %107 = vmatprep.subr.bf16.mxu0 0
    %108 = vmatpush1.bf16.msra.mxu0 0
    %109 = vmatprep.subr.bf16.mxu0 0
    %110 = vmatpush1.bf16.msra.mxu0 0
    %111 = vmatprep.subr.bf16.mxu0 0
    %112 = vmatpush1.bf16.msra.mxu0 %v95
    %113 = vmatprep.subr.bf16.mxu0 0
    %114 = vmatpush2.bf16.msra.mxu0 0
    %115 = vmatprep.subr.bf16.mxu0 0
    %116 = vmatpush2.bf16.msra.mxu0 0
    %117 = vmatprep.subr.bf16.mxu0 0
    %118 = vmatpush2.bf16.msra.mxu0 0
    %119 = vmatprep.subr.bf16.mxu0 0
    %120 = vmatpush2.bf16.msra.mxu0 0
    %121 = vmatprep.subr.bf16.mxu0 0
    %122 = vmatpush2.bf16.msra.mxu0 0
    %123 = vmatprep.subr.bf16.mxu0 0
    %124 = vmatpush2.bf16.msra.mxu0 0
    %125 = vmatprep.subr.bf16.mxu0 0
    %126 = vmatpush2.bf16.msra.mxu0 0
    %127 = vmatprep.subr.bf16.mxu0 0
    %128 = vmatpush2.bf16.msra.mxu0 0
    %129 = vmatprep.mubr.bf16.mxu0 0
    %130 = vmatmul.mubr.bf16.gmra.mxu0 %v46
    %v131 = vpop.f32.mrf.mxu0
    %v132 = vadd.f32 0.0, %v131
    %v133 = vpop.f32.mrf.mxu0
    %v134 = vpop.f32.mrf.mxu0
    %v135 = vpop.f32.mrf.mxu0
    %136 = vdwg.mxu0
    %v138 = vlaneseq
    %v139 = vshrl.u32 %v138, 7
    %v140 = vsub.s32 0, %v139
    %v141 = vrot.slane %v93, %v140
    %v143 = vadd.f32 %v141, %v132
    %v144 = vsel %vm48, %v143, -inf
    %145 = vmax.xlane.f32.xlu0 %v144
    %v146 = vpop.xlane.xlu0 %145
    %v147 = vsub.f32 %v143, %v146
    %v148 = vmul.f32 %v147, 1.442695
    %v149 = vpow.pop %v148
    %v150 = vsel %vm48, %v149, 0.0
    %151 = vadd.xlane.f32.xlu0 %v150
    %v152 = vpop.xlane.xlu0 %151
    %v153 = vlog2.pop %v152
    %v154 = vmul.f32 %v153, 0.6931472
    %v155 = vadd.f32 %v154, %v146
    %v156 = vsub.f32 %v143, %v155
    %157 = vst [vmem:[%s7] sm:$0xf] %v156
    %v158 = vunpack.c.l.bf16 %v42
    %v159 = vunpack.c.l.bf16 %v43
    %v160 = vmul.f32 %v158, %v158
    %161 = vadd.xlane.f32.xlu0 %v160
    %v162 = vpop.xlane.xlu0 %161
    %v163 = vrot.slane %v162, 4
    %v164 = vadd.f32 %v162, %v163
    %v165 = vrot.slane %v164, 2
    %v166 = vadd.f32 %v164, %v165
    %v167 = vrot.slane %v166, 1
    %v168 = vadd.f32 %v166, %v167
    %s169 = vtos %v168
    %v170 = vld [vmem:[%s5] sm:$0x1]
    %v171 = vmul.f32 %v159, %v159
    %v173 = vlaneseq
    %v174 = vshrl.u32 %v173, 7
    %v175 = vsub.s32 0, %v174
    %v176 = vrot.slane %v170, %v175
    %v178 = vmul.f32 %v176, %v171
    %179 = vadd.xlane.f32.xlu0 %v178
    %v180 = vpop.xlane.xlu0 %179
    %v181 = vrot.slane %v180, 4
    %v182 = vadd.f32 %v180, %v181
    %v183 = vrot.slane %v182, 2
    %v184 = vadd.f32 %v182, %v183
    %v185 = vrot.slane %v184, 1
    %v186 = vadd.f32 %v184, %v185
    %s187 = vtos %v186
    %s188 = sld [smem:[#allocation2]]
    %v189 = vstv %s188
    %s190 = sld [smem:[#allocation2 + $0x1]]
    %v191 = vstv %s190
    %s192 = sld [smem:[#allocation2 + $0x2]]
    %v193 = vstv %s192
    %s194 = sld [smem:[#allocation2 + $0x3]]
    %v195 = vstv %s194
    %v196 = vmul.f32 %v193, 768.0
    %v197 = vmul.f32 %v189, 0.5
    %v198 = vstv %s169
    %v199 = vmul.f32 %v197, %v198
    %v200 = vsub.f32 %v196, %v199
    %v201 = vmul.f32 %v195, 64.0
    %v202 = vadd.f32 %v200, %v201
    %v203 = vmul.f32 %v191, 0.5
    %v204 = vstv %s187
    %v205 = vmul.f32 %v203, %v204
    %v206 = vsub.f32 %v202, %v205
    %vm207 = vcmask 0
    %208 = vst.msk [vmem:[#allocation5] sm:$0x1] %vm207, %v206
    // Predicated region
    $region30: #{model_forward.2} parent=1 // pred_check
      _
    $region31: #{model_forward.2} parent=1 // pred_check_branch
      %210 = sbr.rel (0) target = $region33
    $region32: #{model_forward.2} parent=1 // pred_region
      _
    $region33: #{model_forward.2} parent=1 // pred_fallthru
      _
    // Predicated region
    $region34: #{model_forward.2} parent=1 // pred_check
      _
    $region35: #{model_forward.2} parent=1 // pred_check_branch
      %212 = sbr.rel (0) target = $region37
    $region36: #{model_forward.2} parent=1 // pred_region
      _
    $region37: #{model_forward.2} parent=1 // pred_fallthru
      _
    // Predicated region
    $region38: #{model_forward.2} parent=1 // pred_check
      _
    $region39: #{model_forward.2} parent=1 // pred_check_branch
      %214 = sbr.rel (0) target = $region41
    $region40: #{model_forward.2} parent=1 // pred_region
      %s216 = ssub.s32 16, 16
      %217 = vsyncadd [#allocation3], %s216
      %s219 = sshll.u32 [#allocation5], 4
      %s220 = int_to_ptr.vmem [resolvable:$true] %s219
      %222 = dma.vmem_to_hbm [thread:$0]  %s220, 16, %s8, [#allocation3]
    $region41: #{model_forward.2} parent=1 // pred_fallthru
      _
    // Predicated region
    $region42: #{model_forward.2} parent=1 // pred_check
      _
    $region43: #{model_forward.2} parent=1 // pred_check_branch
      %224 = sbr.rel (0) target = $region45
    $region44: #{model_forward.2} parent=1 // pred_region
      _
    $region45: #{model_forward.2} parent=1 // pred_fallthru
      _
    // Predicated region
    $region46: #{model_forward.2} parent=1 // pred_check
      _
    $region47: #{model_forward.2} parent=1 // pred_check_branch
      %226 = sbr.rel (0) target = $region49
    $region48: #{model_forward.2} parent=1 // pred_region
      _
    $region49: #{model_forward.2} parent=1 // pred_fallthru
      _
    // Predicated region
    $region50: #{model_forward.2} parent=1 // pred_check
      _
    $region51: #{model_forward.2} parent=1 // pred_check_branch
      %228 = sbr.rel (0) target = $region53
    $region52: #{model_forward.2} parent=1 // pred_region
      %229 = dma.done [#allocation3], 16
    $region53: #{model_forward.2} parent=1 // pred_fallthru
      _
    %230 = vsyncpa [#allocation3], 1
    %231 = vsyncpa [#allocation4], 1

// kernel: model_forward.3
$region0: #{model_forward.3}
  #allocation0 [shape = 'u32[]', space=smem, size = 0x4, offset = 0x4, fixed_abs, tag = 'smem constant byte address 0x4 - core index']
  #allocation1 [shape = 'u32[144,128]{1,0:T(1,128)}', space=vmem, size = 0x12000, scoped, tag = 'internal scratch']
  %s0 = inlined_call_operand.vmem [shape: f32[4,128], index: 0, kind: input, shape index: {}]
  %s1 = inlined_call_operand.vmem [shape: s32[128,1024], index: 1, kind: input, shape index: {}]
  %s2 = inlined_call_operand.vmem [shape: s32[1,1024], index: 2, kind: input, shape index: {}]
  %s3 = inlined_call_operand.vmem [shape: s32[1,1024], index: 3, kind: input, shape index: {}]
  %s4 = inlined_call_operand.vmem [shape: f32[1,1024], index: 4, kind: output, shape index: {}]
  %s5 = sld [smem:[#allocation0]]
  $region26: #{model_forward.3} parent=0
    _
  %s7 = ssub.s32 1, %s5
  %s8 = scalar_select 0, %s7, %s5
  // Predicated region
  $region2: #{model_forward.3} parent=0 // pred_check
    _
  $region3: #{model_forward.3} parent=0 // pred_check_branch
    %10 = sbr.rel (0) target = $region5
  $region4: #{model_forward.3} parent=0 // pred_region
    _
  $region5: #{model_forward.3} parent=0 // pred_fallthru
    _
  // Predicated region
  $region6: #{model_forward.3} parent=0 // pred_check
    _
  $region7: #{model_forward.3} parent=0 // pred_check_branch
    %12 = sbr.rel (0) target = $region9
  $region8: #{model_forward.3} parent=0 // pred_region
    _
  $region9: #{model_forward.3} parent=0 // pred_fallthru
    _
  // Predicated region
  $region10: #{model_forward.3} parent=0 // pred_check
    _
  $region11: #{model_forward.3} parent=0 // pred_check_branch
    %14 = sbr.rel (0) target = $region13
  $region12: #{model_forward.3} parent=0 // pred_region
    _
  $region13: #{model_forward.3} parent=0 // pred_fallthru
    _
  // Predicated region
  $region14: #{model_forward.3} parent=0 // pred_check
    _
  $region15: #{model_forward.3} parent=0 // pred_check_branch
    %16 = sbr.rel (0) target = $region17
  $region16: #{model_forward.3} parent=0 // pred_region
    _
  $region17: #{model_forward.3} parent=0 // pred_fallthru
    _
  %v17 = vld [vmem:[%s3] sm:$0xff]
  %v18 = vld [vmem:[%s1] sm:$0xff]
  %v19 = vld [vmem:[%s1 + $0x8] sm:$0xff]
  %v20 = vld [vmem:[%s1 + $0x10] sm:$0xff]
  %v21 = vld [vmem:[%s1 + $0x18] sm:$0xff]
  %v22 = vld [vmem:[%s1 + $0x20] sm:$0xff]
  %v23 = vld [vmem:[%s1 + $0x28] sm:$0xff]
  %v24 = vld [vmem:[%s1 + $0x30] sm:$0xff]
  %v25 = vld [vmem:[%s1 + $0x38] sm:$0xff]
  %v26 = vld [vmem:[%s1 + $0x40] sm:$0xff]
  %v27 = vld [vmem:[%s1 + $0x48] sm:$0xff]
  %v28 = vld [vmem:[%s1 + $0x50] sm:$0xff]
  %v29 = vld [vmem:[%s1 + $0x58] sm:$0xff]
  %v30 = vld [vmem:[%s1 + $0x60] sm:$0xff]
  %v31 = vld [vmem:[%s1 + $0x68] sm:$0xff]
  %v32 = vld [vmem:[%s1 + $0x70] sm:$0xff]
  %v33 = vld [vmem:[%s1 + $0x78] sm:$0xff]
  %v34 = vld [vmem:[%s1 + $0x80] sm:$0xff]
  %v35 = vld [vmem:[%s1 + $0x88] sm:$0xff]
  %v36 = vld [vmem:[%s1 + $0x90] sm:$0xff]
  %v37 = vld [vmem:[%s1 + $0x98] sm:$0xff]
  %v38 = vld [vmem:[%s1 + $0xa0] sm:$0xff]
  %v39 = vld [vmem:[%s1 + $0xa8] sm:$0xff]
  %v40 = vld [vmem:[%s1 + $0xb0] sm:$0xff]
  %v41 = vld [vmem:[%s1 + $0xb8] sm:$0xff]
  %v42 = vld [vmem:[%s1 + $0xc0] sm:$0xff]
  %v43 = vld [vmem:[%s1 + $0xc8] sm:$0xff]
  %v44 = vld [vmem:[%s1 + $0xd0] sm:$0xff]
  %v45 = vld [vmem:[%s1 + $0xd8] sm:$0xff]
  %v46 = vld [vmem:[%s1 + $0xe0] sm:$0xff]
  %v47 = vld [vmem:[%s1 + $0xe8] sm:$0xff]
  %v48 = vld [vmem:[%s1 + $0xf0] sm:$0xff]
  %v49 = vld [vmem:[%s1 + $0xf8] sm:$0xff]
  %v50 = vld [vmem:[%s1 + $0x100] sm:$0xff]
  %v51 = vld [vmem:[%s1 + $0x108] sm:$0xff]
  %v52 = vld [vmem:[%s1 + $0x110] sm:$0xff]
  %v53 = vld [vmem:[%s1 + $0x118] sm:$0xff]
  %v54 = vld [vmem:[%s1 + $0x120] sm:$0xff]
  %v55 = vld [vmem:[%s1 + $0x128] sm:$0xff]
  %v56 = vld [vmem:[%s1 + $0x130] sm:$0xff]
  %v57 = vld [vmem:[%s1 + $0x138] sm:$0xff]
  %v58 = vld [vmem:[%s1 + $0x140] sm:$0xff]
  %v59 = vld [vmem:[%s1 + $0x148] sm:$0xff]
  %v60 = vld [vmem:[%s1 + $0x150] sm:$0xff]
  %v61 = vld [vmem:[%s1 + $0x158] sm:$0xff]
  %v62 = vld [vmem:[%s1 + $0x160] sm:$0xff]
  %v63 = vld [vmem:[%s1 + $0x168] sm:$0xff]
  %v64 = vld [vmem:[%s1 + $0x170] sm:$0xff]
  %v65 = vld [vmem:[%s1 + $0x178] sm:$0xff]
  %v66 = vld [vmem:[%s1 + $0x180] sm:$0xff]
  %v67 = vld [vmem:[%s1 + $0x188] sm:$0xff]
  %v68 = vld [vmem:[%s1 + $0x190] sm:$0xff]
  %v69 = vld [vmem:[%s1 + $0x198] sm:$0xff]
  %v70 = vld [vmem:[%s1 + $0x1a0] sm:$0xff]
  %v71 = vld [vmem:[%s1 + $0x1a8] sm:$0xff]
  %v72 = vld [vmem:[%s1 + $0x1b0] sm:$0xff]
  %v73 = vld [vmem:[%s1 + $0x1b8] sm:$0xff]
  %v74 = vld [vmem:[%s1 + $0x1c0] sm:$0xff]
  %v75 = vld [vmem:[%s1 + $0x1c8] sm:$0xff]
  %v76 = vld [vmem:[%s1 + $0x1d0] sm:$0xff]
  %v77 = vld [vmem:[%s1 + $0x1d8] sm:$0xff]
  %v78 = vld [vmem:[%s1 + $0x1e0] sm:$0xff]
  %v79 = vld [vmem:[%s1 + $0x1e8] sm:$0xff]
  %v80 = vld [vmem:[%s1 + $0x1f0] sm:$0xff]
  %v81 = vld [vmem:[%s1 + $0x1f8] sm:$0xff]
  %v82 = vld [vmem:[%s1 + $0x200] sm:$0xff]
  %v83 = vld [vmem:[%s1 + $0x208] sm:$0xff]
  %v84 = vld [vmem:[%s1 + $0x210] sm:$0xff]
  %v85 = vld [vmem:[%s1 + $0x218] sm:$0xff]
  %v86 = vld [vmem:[%s1 + $0x220] sm:$0xff]
  %v87 = vld [vmem:[%s1 + $0x228] sm:$0xff]
  %v88 = vld [vmem:[%s1 + $0x230] sm:$0xff]
  %v89 = vld [vmem:[%s1 + $0x238] sm:$0xff]
  %v90 = vld [vmem:[%s1 + $0x240] sm:$0xff]
  %v91 = vld [vmem:[%s1 + $0x248] sm:$0xff]
  %v92 = vld [vmem:[%s1 + $0x250] sm:$0xff]
  %v93 = vld [vmem:[%s1 + $0x258] sm:$0xff]
  %v94 = vld [vmem:[%s1 + $0x260] sm:$0xff]
  %v95 = vld [vmem:[%s1 + $0x268] sm:$0xff]
  %v96 = vld [vmem:[%s1 + $0x270] sm:$0xff]
  %v97 = vld [vmem:[%s1 + $0x278] sm:$0xff]
  %v98 = vld [vmem:[%s1 + $0x280] sm:$0xff]
  %v99 = vld [vmem:[%s1 + $0x288] sm:$0xff]
  %v100 = vld [vmem:[%s1 + $0x290] sm:$0xff]
  %v101 = vld [vmem:[%s1 + $0x298] sm:$0xff]
  %v102 = vld [vmem:[%s1 + $0x2a0] sm:$0xff]
  %v103 = vld [vmem:[%s1 + $0x2a8] sm:$0xff]
  %v104 = vld [vmem:[%s1 + $0x2b0] sm:$0xff]
  %v105 = vld [vmem:[%s1 + $0x2b8] sm:$0xff]
  %v106 = vld [vmem:[%s1 + $0x2c0] sm:$0xff]
  %v107 = vld [vmem:[%s1 + $0x2c8] sm:$0xff]
  %v108 = vld [vmem:[%s1 + $0x2d0] sm:$0xff]
  %v109 = vld [vmem:[%s1 + $0x2d8] sm:$0xff]
  %v110 = vld [vmem:[%s1 + $0x2e0] sm:$0xff]
  %v111 = vld [vmem:[%s1 + $0x2e8] sm:$0xff]
  %v112 = vld [vmem:[%s1 + $0x2f0] sm:$0xff]
  %v113 = vld [vmem:[%s1 + $0x2f8] sm:$0xff]
  %v114 = vld [vmem:[%s1 + $0x300] sm:$0xff]
  %v115 = vld [vmem:[%s1 + $0x308] sm:$0xff]
  %v116 = vld [vmem:[%s1 + $0x310] sm:$0xff]
  %v117 = vld [vmem:[%s1 + $0x318] sm:$0xff]
  %v118 = vld [vmem:[%s1 + $0x320] sm:$0xff]
  %v119 = vld [vmem:[%s1 + $0x328] sm:$0xff]
  %v120 = vld [vmem:[%s1 + $0x330] sm:$0xff]
  %v121 = vld [vmem:[%s1 + $0x338] sm:$0xff]
  %v122 = vld [vmem:[%s1 + $0x340] sm:$0xff]
  %v123 = vld [vmem:[%s1 + $0x348] sm:$0xff]
  %v124 = vld [vmem:[%s1 + $0x350] sm:$0xff]
  %v125 = vld [vmem:[%s1 + $0x358] sm:$0xff]
  %v126 = vld [vmem:[%s1 + $0x360] sm:$0xff]
  %v127 = vld [vmem:[%s1 + $0x368] sm:$0xff]
  %v128 = vld [vmem:[%s1 + $0x370] sm:$0xff]
  %v129 = vld [vmem:[%s1 + $0x378] sm:$0xff]
  %v130 = vld [vmem:[%s1 + $0x380] sm:$0xff]
  %v131 = vld [vmem:[%s1 + $0x388] sm:$0xff]
  %v132 = vld [vmem:[%s1 + $0x390] sm:$0xff]
  %v133 = vld [vmem:[%s1 + $0x398] sm:$0xff]
  %v134 = vld [vmem:[%s1 + $0x3a0] sm:$0xff]
  %v135 = vld [vmem:[%s1 + $0x3a8] sm:$0xff]
  %v136 = vld [vmem:[%s1 + $0x3b0] sm:$0xff]
  %v137 = vld [vmem:[%s1 + $0x3b8] sm:$0xff]
  %v138 = vld [vmem:[%s1 + $0x3c0] sm:$0xff]
  %v139 = vld [vmem:[%s1 + $0x3c8] sm:$0xff]
  %v140 = vld [vmem:[%s1 + $0x3d0] sm:$0xff]
  %v141 = vld [vmem:[%s1 + $0x3d8] sm:$0xff]
  %v142 = vld [vmem:[%s1 + $0x3e0] sm:$0xff]
  %v143 = vld [vmem:[%s1 + $0x3e8] sm:$0xff]
  %v144 = vld [vmem:[%s1 + $0x3f0] sm:$0xff]
  %v145 = vld [vmem:[%s1 + $0x3f8] sm:$0xff]
  %v146 = vlaneseq
  %v147 = vshrl.u32 %v146, 7
  %v148 = vsub.s32 0, %v147
  %v149 = vrot.slane %v17, %v148
  %v150 = vlaneseq
  %v151 = vshrl.u32 %v150, 7
  %v152 = vsub.s32 1, %v151
  %v153 = vrot.slane %v17, %v152
  %v154 = vlaneseq
  %v155 = vshrl.u32 %v154, 7
  %v156 = vsub.s32 2, %v155
  %v157 = vrot.slane %v17, %v156
  %v158 = vlaneseq
  %v159 = vshrl.u32 %v158, 7
  %v160 = vsub.s32 3, %v159
  %v161 = vrot.slane %v17, %v160
  %v162 = vlaneseq
  %v163 = vshrl.u32 %v162, 7
  %v164 = vsub.s32 4, %v163
  %v165 = vrot.slane %v17, %v164
  %v166 = vlaneseq
  %v167 = vshrl.u32 %v166, 7
  %v168 = vsub.s32 5, %v167
  %v169 = vrot.slane %v17, %v168
  %v170 = vlaneseq
  %v171 = vshrl.u32 %v170, 7
  %v172 = vsub.s32 6, %v171
  %v173 = vrot.slane %v17, %v172
  %v174 = vlaneseq
  %v175 = vshrl.u32 %v174, 7
  %v176 = vsub.s32 7, %v175
  %v177 = vrot.slane %v17, %v176
  %vm178 = vcmp.eq.s32.totalorder %v18, %v149
  %vm179 = vcmp.eq.s32.totalorder %v19, %v153
  %vm180 = vcmp.eq.s32.totalorder %v20, %v157
  %vm181 = vcmp.eq.s32.totalorder %v21, %v161
  %vm182 = vcmp.eq.s32.totalorder %v22, %v165
  %vm183 = vcmp.eq.s32.totalorder %v23, %v169
  %vm184 = vcmp.eq.s32.totalorder %v24, %v173
  %vm185 = vcmp.eq.s32.totalorder %v25, %v177
  %vm186 = vcmp.eq.s32.totalorder %v26, %v149
  %vm187 = vcmp.eq.s32.totalorder %v27, %v153
  %vm188 = vcmp.eq.s32.totalorder %v28, %v157
  %vm189 = vcmp.eq.s32.totalorder %v29, %v161
  %vm190 = vcmp.eq.s32.totalorder %v30, %v165
  %vm191 = vcmp.eq.s32.totalorder %v31, %v169
  %vm192 = vcmp.eq.s32.totalorder %v32, %v173
  %vm193 = vcmp.eq.s32.totalorder %v33, %v177
  %vm194 = vcmp.eq.s32.totalorder %v34, %v149
  %vm195 = vcmp.eq.s32.totalorder %v35, %v153
  %vm196 = vcmp.eq.s32.totalorder %v36, %v157
  %vm197 = vcmp.eq.s32.totalorder %v37, %v161
  %vm198 = vcmp.eq.s32.totalorder %v38, %v165
  %vm199 = vcmp.eq.s32.totalorder %v39, %v169
  %vm200 = vcmp.eq.s32.totalorder %v40, %v173
  %vm201 = vcmp.eq.s32.totalorder %v41, %v177
  %vm202 = vcmp.eq.s32.totalorder %v42, %v149
  %vm203 = vcmp.eq.s32.totalorder %v43, %v153
  %vm204 = vcmp.eq.s32.totalorder %v44, %v157
  %vm205 = vcmp.eq.s32.totalorder %v45, %v161
  %vm206 = vcmp.eq.s32.totalorder %v46, %v165
  %vm207 = vcmp.eq.s32.totalorder %v47, %v169
  %vm208 = vcmp.eq.s32.totalorder %v48, %v173
  %vm209 = vcmp.eq.s32.totalorder %v49, %v177
  %vm210 = vcmp.eq.s32.totalorder %v50, %v149
  %vm211 = vcmp.eq.s32.totalorder %v51, %v153
  %vm212 = vcmp.eq.s32.totalorder %v52, %v157
  %vm213 = vcmp.eq.s32.totalorder %v53, %v161
  %vm214 = vcmp.eq.s32.totalorder %v54, %v165
  %vm215 = vcmp.eq.s32.totalorder %v55, %v169
  %vm216 = vcmp.eq.s32.totalorder %v56, %v173
  %vm217 = vcmp.eq.s32.totalorder %v57, %v177
  %vm218 = vcmp.eq.s32.totalorder %v58, %v149
  %vm219 = vcmp.eq.s32.totalorder %v59, %v153
  %vm220 = vcmp.eq.s32.totalorder %v60, %v157
  %vm221 = vcmp.eq.s32.totalorder %v61, %v161
  %vm222 = vcmp.eq.s32.totalorder %v62, %v165
  %vm223 = vcmp.eq.s32.totalorder %v63, %v169
  %vm224 = vcmp.eq.s32.totalorder %v64, %v173
  %vm225 = vcmp.eq.s32.totalorder %v65, %v177
  %vm226 = vcmp.eq.s32.totalorder %v66, %v149
  %vm227 = vcmp.eq.s32.totalorder %v67, %v153
  %vm228 = vcmp.eq.s32.totalorder %v68, %v157
  %vm229 = vcmp.eq.s32.totalorder %v69, %v161
  %vm230 = vcmp.eq.s32.totalorder %v70, %v165
  %vm231 = vcmp.eq.s32.totalorder %v71, %v169
  %vm232 = vcmp.eq.s32.totalorder %v72, %v173
  %vm233 = vcmp.eq.s32.totalorder %v73, %v177
  %vm234 = vcmp.eq.s32.totalorder %v74, %v149
  %vm235 = vcmp.eq.s32.totalorder %v75, %v153
  %vm236 = vcmp.eq.s32.totalorder %v76, %v157
  %vm237 = vcmp.eq.s32.totalorder %v77, %v161
  %vm238 = vcmp.eq.s32.totalorder %v78, %v165
  %vm239 = vcmp.eq.s32.totalorder %v79, %v169
  %vm240 = vcmp.eq.s32.totalorder %v80, %v173
  %vm241 = vcmp.eq.s32.totalorder %v81, %v177
  %vm242 = vcmp.eq.s32.totalorder %v82, %v149
  %vm243 = vcmp.eq.s32.totalorder %v83, %v153
  %vm244 = vcmp.eq.s32.totalorder %v84, %v157
  %vm245 = vcmp.eq.s32.totalorder %v85, %v161
  %vm246 = vcmp.eq.s32.totalorder %v86, %v165
  %vm247 = vcmp.eq.s32.totalorder %v87, %v169
  %vm248 = vcmp.eq.s32.totalorder %v88, %v173
  %vm249 = vcmp.eq.s32.totalorder %v89, %v177
  %vm250 = vcmp.eq.s32.totalorder %v90, %v149
  %vm251 = vcmp.eq.s32.totalorder %v91, %v153
  %vm252 = vcmp.eq.s32.totalorder %v92, %v157
  %vm253 = vcmp.eq.s32.totalorder %v93, %v161
  %vm254 = vcmp.eq.s32.totalorder %v94, %v165
  %vm255 = vcmp.eq.s32.totalorder %v95, %v169
  %vm256 = vcmp.eq.s32.totalorder %v96, %v173
  %vm257 = vcmp.eq.s32.totalorder %v97, %v177
  %vm258 = vcmp.eq.s32.totalorder %v98, %v149
  %vm259 = vcmp.eq.s32.totalorder %v99, %v153
  %vm260 = vcmp.eq.s32.totalorder %v100, %v157
  %vm261 = vcmp.eq.s32.totalorder %v101, %v161
  %vm262 = vcmp.eq.s32.totalorder %v102, %v165
  %vm263 = vcmp.eq.s32.totalorder %v103, %v169
  %vm264 = vcmp.eq.s32.totalorder %v104, %v173
  %vm265 = vcmp.eq.s32.totalorder %v105, %v177
  %vm266 = vcmp.eq.s32.totalorder %v106, %v149
  %vm267 = vcmp.eq.s32.totalorder %v107, %v153
  %vm268 = vcmp.eq.s32.totalorder %v108, %v157
  %vm269 = vcmp.eq.s32.totalorder %v109, %v161
  %vm270 = vcmp.eq.s32.totalorder %v110, %v165
  %vm271 = vcmp.eq.s32.totalorder %v111, %v169
  %vm272 = vcmp.eq.s32.totalorder %v112, %v173
  %vm273 = vcmp.eq.s32.totalorder %v113, %v177
  %vm274 = vcmp.eq.s32.totalorder %v114, %v149
  %vm275 = vcmp.eq.s32.totalorder %v115, %v153
  %vm276 = vcmp.eq.s32.totalorder %v116, %v157
  %vm277 = vcmp.eq.s32.totalorder %v117, %v161
  %vm278 = vcmp.eq.s32.totalorder %v118, %v165
  %vm279 = vcmp.eq.s32.totalorder %v119, %v169
  %vm280 = vcmp.eq.s32.totalorder %v120, %v173
  %vm281 = vcmp.eq.s32.totalorder %v121, %v177
  %vm282 = vcmp.eq.s32.totalorder %v122, %v149
  %vm283 = vcmp.eq.s32.totalorder %v123, %v153
  %vm284 = vcmp.eq.s32.totalorder %v124, %v157
  %vm285 = vcmp.eq.s32.totalorder %v125, %v161
  %vm286 = vcmp.eq.s32.totalorder %v126, %v165
  %vm287 = vcmp.eq.s32.totalorder %v127, %v169
  %vm288 = vcmp.eq.s32.totalorder %v128, %v173
  %vm289 = vcmp.eq.s32.totalorder %v129, %v177
  %vm290 = vcmp.eq.s32.totalorder %v130, %v149
  %vm291 = vcmp.eq.s32.totalorder %v131, %v153
  %vm292 = vcmp.eq.s32.totalorder %v132, %v157
  %vm293 = vcmp.eq.s32.totalorder %v133, %v161
  %vm294 = vcmp.eq.s32.totalorder %v134, %v165
  %vm295 = vcmp.eq.s32.totalorder %v135, %v169
  %vm296 = vcmp.eq.s32.totalorder %v136, %v173
  %vm297 = vcmp.eq.s32.totalorder %v137, %v177
  %vm298 = vcmp.eq.s32.totalorder %v138, %v149
  %vm299 = vcmp.eq.s32.totalorder %v139, %v153
  %vm300 = vcmp.eq.s32.totalorder %v140, %v157
  %vm301 = vcmp.eq.s32.totalorder %v141, %v161
  %vm302 = vcmp.eq.s32.totalorder %v142, %v165
  %vm303 = vcmp.eq.s32.totalorder %v143, %v169
  %vm304 = vcmp.eq.s32.totalorder %v144, %v173
  %vm305 = vcmp.eq.s32.totalorder %v145, %v177
  %v306 = vsel %vm178, 1, 0
  %v307 = vsel %vm179, 1, 0
  %v308 = vsel %vm180, 1, 0
  %v309 = vsel %vm181, 1, 0
  %v310 = vsel %vm182, 1, 0
  %v311 = vsel %vm183, 1, 0
  %v312 = vsel %vm184, 1, 0
  %v313 = vsel %vm185, 1, 0
  %v314 = vsel %vm186, 1, 0
  %v315 = vsel %vm187, 1, 0
  %v316 = vsel %vm188, 1, 0
  %v317 = vsel %vm189, 1, 0
  %v318 = vsel %vm190, 1, 0
  %v319 = vsel %vm191, 1, 0
  %v320 = vsel %vm192, 1, 0
  %v321 = vsel %vm193, 1, 0
  %v322 = vsel %vm194, 1, 0
  %v323 = vsel %vm195, 1, 0
  %v324 = vsel %vm196, 1, 0
  %v325 = vsel %vm197, 1, 0
  %v326 = vsel %vm198, 1, 0
  %v327 = vsel %vm199, 1, 0
  %v328 = vsel %vm200, 1, 0
  %v329 = vsel %vm201, 1, 0
  %v330 = vsel %vm202, 1, 0
  %v331 = vsel %vm203, 1, 0
  %v332 = vsel %vm204, 1, 0
  %v333 = vsel %vm205, 1, 0
  %v334 = vsel %vm206, 1, 0
  %v335 = vsel %vm207, 1, 0
  %v336 = vsel %vm208, 1, 0
  %v337 = vsel %vm209, 1, 0
  %v338 = vsel %vm210, 1, 0
  %v339 = vsel %vm211, 1, 0
  %v340 = vsel %vm212, 1, 0
  %v341 = vsel %vm213, 1, 0
  %v342 = vsel %vm214, 1, 0
  %v343 = vsel %vm215, 1, 0
  %v344 = vsel %vm216, 1, 0
  %v345 = vsel %vm217, 1, 0
  %v346 = vsel %vm218, 1, 0
  %v347 = vsel %vm219, 1, 0
  %v348 = vsel %vm220, 1, 0
  %v349 = vsel %vm221, 1, 0
  %v350 = vsel %vm222, 1, 0
  %v351 = vsel %vm223, 1, 0
  %v352 = vsel %vm224, 1, 0
  %v353 = vsel %vm225, 1, 0
  %v354 = vsel %vm226, 1, 0
  %v355 = vsel %vm227, 1, 0
  %v356 = vsel %vm228, 1, 0
  %v357 = vsel %vm229, 1, 0
  %v358 = vsel %vm230, 1, 0
  %v359 = vsel %vm231, 1, 0
  %v360 = vsel %vm232, 1, 0
  %v361 = vsel %vm233, 1, 0
  %v362 = vsel %vm234, 1, 0
  %v363 = vsel %vm235, 1, 0
  %v364 = vsel %vm236, 1, 0
  %v365 = vsel %vm237, 1, 0
  %v366 = vsel %vm238, 1, 0
  %v367 = vsel %vm239, 1, 0
  %v368 = vsel %vm240, 1, 0
  %v369 = vsel %vm241, 1, 0
  %v370 = vsel %vm242, 1, 0
  %v371 = vsel %vm243, 1, 0
  %v372 = vsel %vm244, 1, 0
  %v373 = vsel %vm245, 1, 0
  %v374 = vsel %vm246, 1, 0
  %v375 = vsel %vm247, 1, 0
  %v376 = vsel %vm248, 1, 0
  %v377 = vsel %vm249, 1, 0
  %v378 = vsel %vm250, 1, 0
  %v379 = vsel %vm251, 1, 0
  %v380 = vsel %vm252, 1, 0
  %v381 = vsel %vm253, 1, 0
  %v382 = vsel %vm254, 1, 0
  %v383 = vsel %vm255, 1, 0
  %v384 = vsel %vm256, 1, 0
  %v385 = vsel %vm257, 1, 0
  %v386 = vsel %vm258, 1, 0
  %v387 = vsel %vm259, 1, 0
  %v388 = vsel %vm260, 1, 0
  %v389 = vsel %vm261, 1, 0
  %v390 = vsel %vm262, 1, 0
  %v391 = vsel %vm263, 1, 0
  %v392 = vsel %vm264, 1, 0
  %v393 = vsel %vm265, 1, 0
  %v394 = vsel %vm266, 1, 0
  %v395 = vsel %vm267, 1, 0
  %v396 = vsel %vm268, 1, 0
  %v397 = vsel %vm269, 1, 0
  %v398 = vsel %vm270, 1, 0
  %v399 = vsel %vm271, 1, 0
  %v400 = vsel %vm272, 1, 0
  %v401 = vsel %vm273, 1, 0
  %v402 = vsel %vm274, 1, 0
  %v403 = vsel %vm275, 1, 0
  %v404 = vsel %vm276, 1, 0
  %v405 = vsel %vm277, 1, 0
  %v406 = vsel %vm278, 1, 0
  %v407 = vsel %vm279, 1, 0
  %v408 = vsel %vm280, 1, 0
  %v409 = vsel %vm281, 1, 0
  %v410 = vsel %vm282, 1, 0
  %v411 = vsel %vm283, 1, 0
  %v412 = vsel %vm284, 1, 0
  %v413 = vsel %vm285, 1, 0
  %v414 = vsel %vm286, 1, 0
  %v415 = vsel %vm287, 1, 0
  %v416 = vsel %vm288, 1, 0
  %v417 = vsel %vm289, 1, 0
  %v418 = vsel %vm290, 1, 0
  %v419 = vsel %vm291, 1, 0
  %v420 = vsel %vm292, 1, 0
  %v421 = vsel %vm293, 1, 0
  %v422 = vsel %vm294, 1, 0
  %v423 = vsel %vm295, 1, 0
  %v424 = vsel %vm296, 1, 0
  %v425 = vsel %vm297, 1, 0
  %v426 = vsel %vm298, 1, 0
  %v427 = vsel %vm299, 1, 0
  %v428 = vsel %vm300, 1, 0
  %v429 = vsel %vm301, 1, 0
  %v430 = vsel %vm302, 1, 0
  %v431 = vsel %vm303, 1, 0
  %v432 = vsel %vm304, 1, 0
  %v433 = vsel %vm305, 1, 0
  %v434 = vcvt.s32.f32 %v306
  %v435 = vcvt.s32.f32 %v307
  %v436 = vcvt.s32.f32 %v308
  %v437 = vcvt.s32.f32 %v309
  %v438 = vcvt.s32.f32 %v310
  %v439 = vcvt.s32.f32 %v311
  %v440 = vcvt.s32.f32 %v312
  %v441 = vcvt.s32.f32 %v313
  %v442 = vcvt.s32.f32 %v314
  %v443 = vcvt.s32.f32 %v315
  %v444 = vcvt.s32.f32 %v316
  %v445 = vcvt.s32.f32 %v317
  %v446 = vcvt.s32.f32 %v318
  %v447 = vcvt.s32.f32 %v319
  %v448 = vcvt.s32.f32 %v320
  %v449 = vcvt.s32.f32 %v321
  %v450 = vcvt.s32.f32 %v322
  %v451 = vcvt.s32.f32 %v323
  %v452 = vcvt.s32.f32 %v324
  %v453 = vcvt.s32.f32 %v325
  %v454 = vcvt.s32.f32 %v326
  %v455 = vcvt.s32.f32 %v327
  %v456 = vcvt.s32.f32 %v328
  %v457 = vcvt.s32.f32 %v329
  %v458 = vcvt.s32.f32 %v330
  %v459 = vcvt.s32.f32 %v331
  %v460 = vcvt.s32.f32 %v332
  %v461 = vcvt.s32.f32 %v333
  %v462 = vcvt.s32.f32 %v334
  %v463 = vcvt.s32.f32 %v335
  %v464 = vcvt.s32.f32 %v336
  %v465 = vcvt.s32.f32 %v337
  %v466 = vcvt.s32.f32 %v338
  %v467 = vcvt.s32.f32 %v339
  %v468 = vcvt.s32.f32 %v340
  %v469 = vcvt.s32.f32 %v341
  %v470 = vcvt.s32.f32 %v342
  %v471 = vcvt.s32.f32 %v343
  %v472 = vcvt.s32.f32 %v344
  %v473 = vcvt.s32.f32 %v345
  %v474 = vcvt.s32.f32 %v346
  %v475 = vcvt.s32.f32 %v347
  %v476 = vcvt.s32.f32 %v348
  %v477 = vcvt.s32.f32 %v349
  %v478 = vcvt.s32.f32 %v350
  %v479 = vcvt.s32.f32 %v351
  %v480 = vcvt.s32.f32 %v352
  %v481 = vcvt.s32.f32 %v353
  %v482 = vcvt.s32.f32 %v354
  %v483 = vcvt.s32.f32 %v355
  %v484 = vcvt.s32.f32 %v356
  %v485 = vcvt.s32.f32 %v357
  %v486 = vcvt.s32.f32 %v358
  %v487 = vcvt.s32.f32 %v359
  %v488 = vcvt.s32.f32 %v360
  %v489 = vcvt.s32.f32 %v361
  %v490 = vcvt.s32.f32 %v362
  %v491 = vcvt.s32.f32 %v363
  %v492 = vcvt.s32.f32 %v364
  %v493 = vcvt.s32.f32 %v365
  %v494 = vcvt.s32.f32 %v366
  %v495 = vcvt.s32.f32 %v367
  %v496 = vcvt.s32.f32 %v368
  %v497 = vcvt.s32.f32 %v369
  %v498 = vcvt.s32.f32 %v370
  %v499 = vcvt.s32.f32 %v371
  %v500 = vcvt.s32.f32 %v372
  %v501 = vcvt.s32.f32 %v373
  %v502 = vcvt.s32.f32 %v374
  %v503 = vcvt.s32.f32 %v375
  %v504 = vcvt.s32.f32 %v376
  %v505 = vcvt.s32.f32 %v377
  %v506 = vcvt.s32.f32 %v378
  %v507 = vcvt.s32.f32 %v379
  %v508 = vcvt.s32.f32 %v380
  %v509 = vcvt.s32.f32 %v381
  %v510 = vcvt.s32.f32 %v382
  %v511 = vcvt.s32.f32 %v383
  %v512 = vcvt.s32.f32 %v384
  %v513 = vcvt.s32.f32 %v385
  %v514 = vcvt.s32.f32 %v386
  %v515 = vcvt.s32.f32 %v387
  %v516 = vcvt.s32.f32 %v388
  %v517 = vcvt.s32.f32 %v389
  %v518 = vcvt.s32.f32 %v390
  %v519 = vcvt.s32.f32 %v391
  %v520 = vcvt.s32.f32 %v392
  %v521 = vcvt.s32.f32 %v393
  %v522 = vcvt.s32.f32 %v394
  %v523 = vcvt.s32.f32 %v395
  %v524 = vcvt.s32.f32 %v396
  %v525 = vcvt.s32.f32 %v397
  %v526 = vcvt.s32.f32 %v398
  %v527 = vcvt.s32.f32 %v399
  %v528 = vcvt.s32.f32 %v400
  %v529 = vcvt.s32.f32 %v401
  %v530 = vcvt.s32.f32 %v402
  %v531 = vcvt.s32.f32 %v403
  %v532 = vcvt.s32.f32 %v404
  %v533 = vcvt.s32.f32 %v405
  %v534 = vcvt.s32.f32 %v406
  %v535 = vcvt.s32.f32 %v407
  %v536 = vcvt.s32.f32 %v408
  %v537 = vcvt.s32.f32 %v409
  %v538 = vcvt.s32.f32 %v410
  %v539 = vcvt.s32.f32 %v411
  %v540 = vcvt.s32.f32 %v412
  %v541 = vcvt.s32.f32 %v413
  %v542 = vcvt.s32.f32 %v414
  %v543 = vcvt.s32.f32 %v415
  %v544 = vcvt.s32.f32 %v416
  %v545 = vcvt.s32.f32 %v417
  %v546 = vcvt.s32.f32 %v418
  %v547 = vcvt.s32.f32 %v419
  %v548 = vcvt.s32.f32 %v420
  %v549 = vcvt.s32.f32 %v421
  %v550 = vcvt.s32.f32 %v422
  %v551 = vcvt.s32.f32 %v423
  %v552 = vcvt.s32.f32 %v424
  %v553 = vcvt.s32.f32 %v425
  %v554 = vcvt.s32.f32 %v426
  %v555 = vcvt.s32.f32 %v427
  %v556 = vcvt.s32.f32 %v428
  %v557 = vcvt.s32.f32 %v429
  %v558 = vcvt.s32.f32 %v430
  %v559 = vcvt.s32.f32 %v431
  %v560 = vcvt.s32.f32 %v432
  %v561 = vcvt.s32.f32 %v433
  %v562 = vld [vmem:[%s0] sm:$0xf]
  %563 = vmatprep.subr.mxu0 %v555
  %564 = vmatpush1.msra.mxu0 %v554
  %565 = vmatprep.subr.mxu0 %v547
  %566 = vmatpush1.msra.mxu0 %v546
  %567 = vmatprep.subr.mxu0 %v539
  %568 = vmatpush1.msra.mxu0 %v538
  %569 = vmatprep.subr.mxu0 %v531
  %570 = vmatpush1.msra.mxu0 %v530
  %571 = vmatprep.subr.mxu0 %v523
  %572 = vmatpush1.msra.mxu0 %v522
  %573 = vmatprep.subr.mxu0 %v515
  %574 = vmatpush1.msra.mxu0 %v514
  %575 = vmatprep.subr.mxu0 %v507
  %576 = vmatpush1.msra.mxu0 %v506
  %577 = vmatprep.subr.mxu0 %v499
  %578 = vmatpush1.msra.mxu0 %v498
  %579 = vmatprep.subr.mxu0 %v491
  %580 = vmatpush1.msra.mxu0 %v490
  %581 = vmatprep.subr.mxu0 %v483
  %582 = vmatpush1.msra.mxu0 %v482
  %583 = vmatprep.subr.mxu0 %v475
  %584 = vmatpush1.msra.mxu0 %v474
  %585 = vmatprep.subr.mxu0 %v467
  %586 = vmatpush1.msra.mxu0 %v466
  %587 = vmatprep.subr.mxu0 %v459
  %588 = vmatpush1.msra.mxu0 %v458
  %589 = vmatprep.subr.mxu0 %v451
  %590 = vmatpush1.msra.mxu0 %v450
  %591 = vmatprep.subr.mxu0 %v443
  %592 = vmatpush1.msra.mxu0 %v442
  %593 = vmatprep.subr.mxu0 %v435
  %594 = vmatpush1.msra.mxu0 %v434
  %595 = vmatprep.subr.mxu0 0.0
  %596 = vmatpush2.msra.mxu0 0.0
  %597 = vmatprep.subr.mxu0 0.0
  %598 = vmatpush2.msra.mxu0 0.0
  %599 = vmatprep.subr.mxu0 0.0
  %600 = vmatpush2.msra.mxu0 0.0
  %601 = vmatprep.subr.mxu0 0.0
  %602 = vmatpush2.msra.mxu0 0.0
  %603 = vmatprep.subr.mxu0 0.0
  %604 = vmatpush2.msra.mxu0 0.0
  %605 = vmatprep.subr.mxu0 0.0
  %606 = vmatpush2.msra.mxu0 0.0
  %607 = vmatprep.subr.mxu0 0.0
  %608 = vmatpush2.msra.mxu0 0.0
  %609 = vmatprep.subr.mxu0 0.0
  %610 = vmatpush2.msra.mxu0 0.0
  %611 = vmatprep.subr.mxu0 0.0
  %612 = vmatpush2.msra.mxu0 0.0
  %613 = vmatprep.subr.mxu0 0.0
  %614 = vmatpush2.msra.mxu0 0.0
  %615 = vmatprep.subr.mxu0 0.0
  %616 = vmatpush2.msra.mxu0 0.0
  %617 = vmatprep.subr.mxu0 0.0
  %618 = vmatpush2.msra.mxu0 0.0
  %619 = vmatprep.subr.mxu0 0.0
  %620 = vmatpush2.msra.mxu0 0.0
  %621 = vmatprep.subr.mxu0 0.0
  %622 = vmatpush2.msra.mxu0 0.0
  %623 = vmatprep.subr.mxu0 0.0
  %624 = vmatpush2.msra.mxu0 0.0
  %625 = vmatprep.subr.mxu0 0.0
  %626 = vmatpush2.msra.mxu0 0.0
  %627 = vmatprep.mubr.f32.mxu0 0.0
  %628 = vmatmul.mubr.f32.gmra.mxu0 %v562
  %v629 = vpop.f32.mrf.mxu0
  %v630 = vadd.f32 0.0, %v629
  %v631 = vpop.f32.mrf.mxu0
  %v632 = vadd.f32 0.0, %v631
  %633 = vdwg.mxu0
  %634 = vmatprep.subr.mxu0 %v557
  %635 = vmatpush1.msra.mxu0 %v556
  %636 = vmatprep.subr.mxu0 %v549
  %637 = vmatpush1.msra.mxu0 %v548
  %638 = vmatprep.subr.mxu0 %v541
  %639 = vmatpush1.msra.mxu0 %v540
  %640 = vmatprep.subr.mxu0 %v533
  %641 = vmatpush1.msra.mxu0 %v532
  %642 = vmatprep.subr.mxu0 %v525
  %643 = vmatpush1.msra.mxu0 %v524
  %644 = vmatprep.subr.mxu0 %v517
  %645 = vmatpush1.msra.mxu0 %v516
  %646 = vmatprep.subr.mxu0 %v509
  %647 = vmatpush1.msra.mxu0 %v508
  %648 = vmatprep.subr.mxu0 %v501
  %649 = vmatpush1.msra.mxu0 %v500
  %650 = vmatprep.subr.mxu0 %v493
  %651 = vmatpush1.msra.mxu0 %v492
  %652 = vmatprep.subr.mxu0 %v485
  %653 = vmatpush1.msra.mxu0 %v484
  %654 = vmatprep.subr.mxu0 %v477
  %655 = vmatpush1.msra.mxu0 %v476
  %656 = vmatprep.subr.mxu0 %v469
  %657 = vmatpush1.msra.mxu0 %v468
  %658 = vmatprep.subr.mxu0 %v461
  %659 = vmatpush1.msra.mxu0 %v460
  %660 = vmatprep.subr.mxu0 %v453
  %661 = vmatpush1.msra.mxu0 %v452
  %662 = vmatprep.subr.mxu0 %v445
  %663 = vmatpush1.msra.mxu0 %v444
  %664 = vmatprep.subr.mxu0 %v437
  %665 = vmatpush1.msra.mxu0 %v436
  %666 = vmatprep.subr.mxu0 0.0
  %667 = vmatpush2.msra.mxu0 0.0
  %668 = vmatprep.subr.mxu0 0.0
  %669 = vmatpush2.msra.mxu0 0.0
  %670 = vmatprep.subr.mxu0 0.0
  %671 = vmatpush2.msra.mxu0 0.0
  %672 = vmatprep.subr.mxu0 0.0
  %673 = vmatpush2.msra.mxu0 0.0
  %674 = vmatprep.subr.mxu0 0.0
  %675 = vmatpush2.msra.mxu0 0.0
  %676 = vmatprep.subr.mxu0 0.0
  %677 = vmatpush2.msra.mxu0 0.0
  %678 = vmatprep.subr.mxu0 0.0
  %679 = vmatpush2.msra.mxu0 0.0
  %680 = vmatprep.subr.mxu0 0.0
  %681 = vmatpush2.msra.mxu0 0.0
  %682 = vmatprep.subr.mxu0 0.0
  %683 = vmatpush2.msra.mxu0 0.0
  %684 = vmatprep.subr.mxu0 0.0
  %685 = vmatpush2.msra.mxu0 0.0
  %686 = vmatprep.subr.mxu0 0.0
  %687 = vmatpush2.msra.mxu0 0.0
  %688 = vmatprep.subr.mxu0 0.0
  %689 = vmatpush2.msra.mxu0 0.0
  %690 = vmatprep.subr.mxu0 0.0
  %691 = vmatpush2.msra.mxu0 0.0
  %692 = vmatprep.subr.mxu0 0.0
  %693 = vmatpush2.msra.mxu0 0.0
  %694 = vmatprep.subr.mxu0 0.0
  %695 = vmatpush2.msra.mxu0 0.0
  %696 = vmatprep.subr.mxu0 0.0
  %697 = vmatpush2.msra.mxu0 0.0
  %698 = vmatprep.mubr.f32.mxu0 0.0
  %699 = vmatmul.mubr.f32.gmra.mxu0 %v562
  %v700 = vpop.f32.mrf.mxu0
  %v701 = vadd.f32 0.0, %v700
  %v702 = vpop.f32.mrf.mxu0
  %v703 = vadd.f32 0.0, %v702
  %704 = vdwg.mxu0
  %705 = vmatprep.subr.mxu0 %v559
  %706 = vmatpush1.msra.mxu0 %v558
  %707 = vmatprep.subr.mxu0 %v551
  %708 = vmatpush1.msra.mxu0 %v550
  %709 = vmatprep.subr.mxu0 %v543
  %710 = vmatpush1.msra.mxu0 %v542
  %711 = vmatprep.subr.mxu0 %v535
  %712 = vmatpush1.msra.mxu0 %v534
  %713 = vmatprep.subr.mxu0 %v527
  %714 = vmatpush1.msra.mxu0 %v526
  %715 = vmatprep.subr.mxu0 %v519
  %716 = vmatpush1.msra.mxu0 %v518
  %717 = vmatprep.subr.mxu0 %v511
  %718 = vmatpush1.msra.mxu0 %v510
  %719 = vmatprep.subr.mxu0 %v503
  %720 = vmatpush1.msra.mxu0 %v502
  %721 = vmatprep.subr.mxu0 %v495
  %722 = vmatpush1.msra.mxu0 %v494
  %723 = vmatprep.subr.mxu0 %v487
  %724 = vmatpush1.msra.mxu0 %v486
  %725 = vmatprep.subr.mxu0 %v479
  %726 = vmatpush1.msra.mxu0 %v478
  %727 = vmatprep.subr.mxu0 %v471
  %728 = vmatpush1.msra.mxu0 %v470
  %729 = vmatprep.subr.mxu0 %v463
  %730 = vmatpush1.msra.mxu0 %v462
  %731 = vmatprep.subr.mxu0 %v455
  %732 = vmatpush1.msra.mxu0 %v454
  %733 = vmatprep.subr.mxu0 %v447
  %734 = vmatpush1.msra.mxu0 %v446
  %735 = vmatprep.subr.mxu0 %v439
  %736 = vmatpush1.msra.mxu0 %v438
  %737 = vmatprep.subr.mxu0 0.0
  %738 = vmatpush2.msra.mxu0 0.0
  %739 = vmatprep.subr.mxu0 0.0
  %740 = vmatpush2.msra.mxu0 0.0
  %741 = vmatprep.subr.mxu0 0.0
  %742 = vmatpush2.msra.mxu0 0.0
  %743 = vmatprep.subr.mxu0 0.0
  %744 = vmatpush2.msra.mxu0 0.0
  %745 = vmatprep.subr.mxu0 0.0
  %746 = vmatpush2.msra.mxu0 0.0
  %747 = vmatprep.subr.mxu0 0.0
  %748 = vmatpush2.msra.mxu0 0.0
  %749 = vmatprep.subr.mxu0 0.0
  %750 = vmatpush2.msra.mxu0 0.0
  %751 = vmatprep.subr.mxu0 0.0
  %752 = vmatpush2.msra.mxu0 0.0
  %753 = vmatprep.subr.mxu0 0.0
  %754 = vmatpush2.msra.mxu0 0.0
  %755 = vmatprep.subr.mxu0 0.0
  %756 = vmatpush2.msra.mxu0 0.0
  %757 = vmatprep.subr.mxu0 0.0
  %758 = vmatpush2.msra.mxu0 0.0
  %759 = vmatprep.subr.mxu0 0.0
  %760 = vmatpush2.msra.mxu0 0.0
  %761 = vmatprep.subr.mxu0 0.0
  %762 = vmatpush2.msra.mxu0 0.0
  %763 = vmatprep.subr.mxu0 0.0
  %764 = vmatpush2.msra.mxu0 0.0
  %765 = vmatprep.subr.mxu0 0.0
  %766 = vmatpush2.msra.mxu0 0.0
  %767 = vmatprep.subr.mxu0 0.0
  %768 = vmatpush2.msra.mxu0 0.0
  %769 = vmatprep.mubr.f32.mxu0 0.0
  %770 = vmatmul.mubr.f32.gmra.mxu0 %v562
  %v771 = vpop.f32.mrf.mxu0
  %v772 = vadd.f32 0.0, %v771
  %v773 = vpop.f32.mrf.mxu0
  %v774 = vadd.f32 0.0, %v773
  %775 = vdwg.mxu0
  %776 = vmatprep.subr.mxu0 %v561
  %777 = vmatpush1.msra.mxu0 %v560
  %778 = vmatprep.subr.mxu0 %v553
  %779 = vmatpush1.msra.mxu0 %v552
  %780 = vmatprep.subr.mxu0 %v545
  %781 = vmatpush1.msra.mxu0 %v544
  %782 = vmatprep.subr.mxu0 %v537
  %783 = vmatpush1.msra.mxu0 %v536
  %784 = vmatprep.subr.mxu0 %v529
  %785 = vmatpush1.msra.mxu0 %v528
  %786 = vmatprep.subr.mxu0 %v521
  %787 = vmatpush1.msra.mxu0 %v520
  %788 = vmatprep.subr.mxu0 %v513
  %789 = vmatpush1.msra.mxu0 %v512
  %790 = vmatprep.subr.mxu0 %v505
  %791 = vmatpush1.msra.mxu0 %v504
  %792 = vmatprep.subr.mxu0 %v497
  %793 = vmatpush1.msra.mxu0 %v496
  %794 = vmatprep.subr.mxu0 %v489
  %795 = vmatpush1.msra.mxu0 %v488
  %796 = vmatprep.subr.mxu0 %v481
  %797 = vmatpush1.msra.mxu0 %v480
  %798 = vmatprep.subr.mxu0 %v473
  %799 = vmatpush1.msra.mxu0 %v472
  %800 = vmatprep.subr.mxu0 %v465
  %801 = vmatpush1.msra.mxu0 %v464
  %802 = vmatprep.subr.mxu0 %v457
  %803 = vmatpush1.msra.mxu0 %v456
  %804 = vmatprep.subr.mxu0 %v449
  %805 = vmatpush1.msra.mxu0 %v448
  %806 = vmatprep.subr.mxu0 %v441
  %807 = vmatpush1.msra.mxu0 %v440
  %808 = vmatprep.subr.mxu0 0.0
  %809 = vmatpush2.msra.mxu0 0.0
  %810 = vmatprep.subr.mxu0 0.0
  %811 = vmatpush2.msra.mxu0 0.0
  %812 = vmatprep.subr.mxu0 0.0
  %813 = vmatpush2.msra.mxu0 0.0
  %814 = vmatprep.subr.mxu0 0.0
  %815 = vmatpush2.msra.mxu0 0.0
  %816 = vmatprep.subr.mxu0 0.0
  %817 = vmatpush2.msra.mxu0 0.0
  %818 = vmatprep.subr.mxu0 0.0
  %819 = vmatpush2.msra.mxu0 0.0
  %820 = vmatprep.subr.mxu0 0.0
  %821 = vmatpush2.msra.mxu0 0.0
  %822 = vmatprep.subr.mxu0 0.0
  %823 = vmatpush2.msra.mxu0 0.0
  %824 = vmatprep.subr.mxu0 0.0
  %825 = vmatpush2.msra.mxu0 0.0
  %826 = vmatprep.subr.mxu0 0.0
  %827 = vmatpush2.msra.mxu0 0.0
  %828 = vmatprep.subr.mxu0 0.0
  %829 = vmatpush2.msra.mxu0 0.0
  %830 = vmatprep.subr.mxu0 0.0
  %831 = vmatpush2.msra.mxu0 0.0
  %832 = vmatprep.subr.mxu0 0.0
  %833 = vmatpush2.msra.mxu0 0.0
  %834 = vmatprep.subr.mxu0 0.0
  %835 = vmatpush2.msra.mxu0 0.0
  %836 = vmatprep.subr.mxu0 0.0
  %837 = vmatpush2.msra.mxu0 0.0
  %838 = vmatprep.subr.mxu0 0.0
  %839 = vmatpush2.msra.mxu0 0.0
  %840 = vmatprep.mubr.f32.mxu0 0.0
  %841 = vmatmul.mubr.f32.gmra.mxu0 %v562
  %v842 = vpop.f32.mrf.mxu0
  %v843 = vadd.f32 0.0, %v842
  %v844 = vpop.f32.mrf.mxu0
  %v845 = vadd.f32 0.0, %v844
  %846 = vdwg.mxu0
  %v847 = vlaneseq
  %v848 = vshrl.u32 %v847, 7
  %v849 = vld [vmem:[%s2] sm:$0xff]
  %v850 = vlaneseq
  %v851 = vshrl.u32 %v850, 7
  %v852 = vsub.s32 0, %v851
  %v853 = vrot.slane %v849, %v852
  %v854 = vlaneseq
  %v855 = vshrl.u32 %v854, 7
  %v856 = vsub.s32 1, %v855
  %v857 = vrot.slane %v849, %v856
  %v858 = vlaneseq
  %v859 = vshrl.u32 %v858, 7
  %v860 = vsub.s32 2, %v859
  %v861 = vrot.slane %v849, %v860
  %v862 = vlaneseq
  %v863 = vshrl.u32 %v862, 7
  %v864 = vsub.s32 3, %v863
  %v865 = vrot.slane %v849, %v864
  %v866 = vlaneseq
  %v867 = vshrl.u32 %v866, 7
  %v868 = vsub.s32 4, %v867
  %v869 = vrot.slane %v849, %v868
  %v870 = vlaneseq
  %v871 = vshrl.u32 %v870, 7
  %v872 = vsub.s32 5, %v871
  %v873 = vrot.slane %v849, %v872
  %v874 = vlaneseq
  %v875 = vshrl.u32 %v874, 7
  %v876 = vsub.s32 6, %v875
  %v877 = vrot.slane %v849, %v876
  %v878 = vlaneseq
  %v879 = vshrl.u32 %v878, 7
  %v880 = vsub.s32 7, %v879
  %v881 = vrot.slane %v849, %v880
  %vm882 = vcmp.eq.s32.totalorder %v848, %v853
  %vm883 = vcmp.eq.s32.totalorder %v848, %v857
  %vm884 = vcmp.eq.s32.totalorder %v848, %v861
  %vm885 = vcmp.eq.s32.totalorder %v848, %v865
  %vm886 = vcmp.eq.s32.totalorder %v848, %v869
  %vm887 = vcmp.eq.s32.totalorder %v848, %v873
  %vm888 = vcmp.eq.s32.totalorder %v848, %v877
  %vm889 = vcmp.eq.s32.totalorder %v848, %v881
  %v890 = vsel %vm882, 1, 0
  %v891 = vsel %vm883, 1, 0
  %v892 = vsel %vm884, 1, 0
  %v893 = vsel %vm885, 1, 0
  %v894 = vsel %vm886, 1, 0
  %v895 = vsel %vm887, 1, 0
  %v896 = vsel %vm888, 1, 0
  %v897 = vsel %vm889, 1, 0
  %v898 = vcvt.s32.f32 %v890
  %v899 = vcvt.s32.f32 %v891
  %v900 = vcvt.s32.f32 %v892
  %v901 = vcvt.s32.f32 %v893
  %v902 = vcvt.s32.f32 %v894
  %v903 = vcvt.s32.f32 %v895
  %v904 = vcvt.s32.f32 %v896
  %v905 = vcvt.s32.f32 %v897
  %v906 = vmul.f32 %v898, %v630
  %v907 = vmul.f32 %v899, %v632
  %v908 = vmul.f32 %v900, %v701
  %v909 = vmul.f32 %v901, %v703
  %v910 = vmul.f32 %v902, %v772
  %v911 = vmul.f32 %v903, %v774
  %v912 = vmul.f32 %v904, %v843
  %v913 = vmul.f32 %v905, %v845
  %vm914 = vcmask 1043456
  %v915 = vsel %vm914, %v906, 0.0
  %v916 = vrot.slane %v915, 4
  %v917 = vadd.f32 %v915, %v916
  %v918 = vrot.slane %v917, 2
  %v919 = vadd.f32 %v917, %v918
  %v920 = vrot.slane %v919, 1
  %v921 = vadd.f32 %v919, %v920
  %v922 = vsel %vm914, %v907, 0.0
  %v923 = vrot.slane %v922, 4
  %v924 = vadd.f32 %v922, %v923
  %v925 = vrot.slane %v924, 2
  %v926 = vadd.f32 %v924, %v925
  %v927 = vrot.slane %v926, 1
  %v928 = vadd.f32 %v926, %v927
  %v929 = vsel %vm914, %v908, 0.0
  %v930 = vrot.slane %v929, 4
  %v931 = vadd.f32 %v929, %v930
  %v932 = vrot.slane %v931, 2
  %v933 = vadd.f32 %v931, %v932
  %v934 = vrot.slane %v933, 1
  %v935 = vadd.f32 %v933, %v934
  %v936 = vsel %vm914, %v909, 0.0
  %v937 = vrot.slane %v936, 4
  %v938 = vadd.f32 %v936, %v937
  %v939 = vrot.slane %v938, 2
  %v940 = vadd.f32 %v938, %v939
  %v941 = vrot.slane %v940, 1
  %v942 = vadd.f32 %v940, %v941
  %v943 = vsel %vm914, %v910, 0.0
  %v944 = vrot.slane %v943, 4
  %v945 = vadd.f32 %v943, %v944
  %v946 = vrot.slane %v945, 2
  %v947 = vadd.f32 %v945, %v946
  %v948 = vrot.slane %v947, 1
  %v949 = vadd.f32 %v947, %v948
  %v950 = vsel %vm914, %v911, 0.0
  %v951 = vrot.slane %v950, 4
  %v952 = vadd.f32 %v950, %v951
  %v953 = vrot.slane %v952, 2
  %v954 = vadd.f32 %v952, %v953
  %v955 = vrot.slane %v954, 1
  %v956 = vadd.f32 %v954, %v955
  %v957 = vsel %vm914, %v912, 0.0
  %v958 = vrot.slane %v957, 4
  %v959 = vadd.f32 %v957, %v958
  %v960 = vrot.slane %v959, 2
  %v961 = vadd.f32 %v959, %v960
  %v962 = vrot.slane %v961, 1
  %v963 = vadd.f32 %v961, %v962
  %v964 = vsel %vm914, %v913, 0.0
  %v965 = vrot.slane %v964, 4
  %v966 = vadd.f32 %v964, %v965
  %v967 = vrot.slane %v966, 2
  %v968 = vadd.f32 %v966, %v967
  %v969 = vrot.slane %v968, 1
  %v970 = vadd.f32 %v968, %v969
  %v971 = vadd.f32 %v921, 2.7725887
  %v972 = vadd.f32 %v928, 2.7725887
  %v973 = vadd.f32 %v935, 2.7725887
  %v974 = vadd.f32 %v942, 2.7725887
  %v975 = vadd.f32 %v949, 2.7725887
  %v976 = vadd.f32 %v956, 2.7725887
  %v977 = vadd.f32 %v963, 2.7725887
  %v978 = vadd.f32 %v970, 2.7725887
  %v987 = vcombine.low %v971, %v972
  %v988 = vcombine.low %v973, %v974
  %v989 = vcombine.low %v975, %v976
  %v990 = vcombine.low %v977, %v978
  %v992 = vunpack.c.l.s4 1966171168
  %v993 = vunpack.c.0.s8 %v992
  %v994 = vlaneseq
  %v995 = vshrl.u32 %v994, 7
  %v996 = vsub.s32 %v993, %v995
  %v997 = vrot.slane %v987, %v996
  %v999 = vunpack.c.l.s4 1966171168
  %v1000 = vunpack.c.0.s8 %v999
  %v1001 = vlaneseq
  %v1002 = vshrl.u32 %v1001, 7
  %v1003 = vsub.s32 %v1000, %v1002
  %v1004 = vrot.slane %v988, %v1003
  %v1006 = vunpack.c.l.s4 1966171168
  %v1007 = vunpack.c.0.s8 %v1006
  %v1008 = vlaneseq
  %v1009 = vshrl.u32 %v1008, 7
  %v1010 = vsub.s32 %v1007, %v1009
  %v1011 = vrot.slane %v989, %v1010
  %v1013 = vunpack.c.l.s4 1966171168
  %v1014 = vunpack.c.0.s8 %v1013
  %v1015 = vlaneseq
  %v1016 = vshrl.u32 %v1015, 7
  %v1017 = vsub.s32 %v1014, %v1016
  %v1018 = vrot.slane %v990, %v1017
  %v1019 = vcombine.low %v997, %v1004
  %v1020 = vcombine.low %v1011, %v1018
  %v1022 = vunpack.c.l.s4 1966171168
  %v1023 = vunpack.c.0.s8 %v1022
  %v1024 = vlaneseq
  %v1025 = vshrl.u32 %v1024, 7
  %v1026 = vsub.s32 %v1023, %v1025
  %v1027 = vrot.slane %v1019, %v1026
  %v1029 = vunpack.c.l.s4 1966171168
  %v1030 = vunpack.c.0.s8 %v1029
  %v1031 = vlaneseq
  %v1032 = vshrl.u32 %v1031, 7
  %v1033 = vsub.s32 %v1030, %v1032
  %v1034 = vrot.slane %v1020, %v1033
  %v1035 = vcombine.low %v1027, %v1034
  %1037 = vst [vmem:[%s4] sm:$0xff] %v1035
  // Predicated region
  $region18: #{model_forward.3} parent=0 // pred_check
    _
  $region19: #{model_forward.3} parent=0 // pred_check_branch
    %1039 = sbr.rel (0) target = $region21
  $region20: #{model_forward.3} parent=0 // pred_region
    _
  $region21: #{model_forward.3} parent=0 // pred_fallthru
    _
  // Predicated region
  $region22: #{model_forward.3} parent=0 // pred_check
    _
  $region23: #{model_forward.3} parent=0 // pred_check_branch
    %1041 = sbr.rel (0) target = $region25
  $region24: #{model_forward.3} parent=0 // pred_region
    _
  $region25: #{model_forward.3} parent=0 // pred_fallthru
    _

</llo_original>
